<compile_context>
chip_gen: v7x
topology: tpu7x:2x2x1
jax: 0.10.0
libtpu: 0.0.40
codegen_flags: <defaults>
</compile_context>

<pallas_src>
import functools
import math

import jax
import jax.numpy as jnp
from jax.experimental import pallas as pl
from jax.experimental.pallas import tpu as pltpu

# ----------------------------- tiny LLaMA config -----------------------------
VOCAB = 256
N_LAYER = 2
N_HEAD = 4
HEAD_DIM = 8
N_EMBD = N_HEAD * HEAD_DIM          # 32
N_HIDDEN = 64                       # SwiGLU hidden (synthetic small size)
EPS = 1e-5
TEMPERATURE = 1.0                   # lit_llama generate default
NEG_INF = -1e30
_PER_LAYER_REFS = 6                 # rms1, wqkv(packed), wo, rms2, w13, w2


# ------------------------------ fused decode kernel ---------------------------
def _generate_kernel(prompt_oh_ref, prompt_ids_ref, emb_ref, cos_ref, sin_ref,
                     gmat_ref, gmat_t_ref, gum_ref, lnf_ref, head_ref, *rest,
                     prompt_len):
    n_layer_refs = _PER_LAYER_REFS * N_LAYER
    layer_refs = rest[:n_layer_refs]
    out_ref = rest[n_layer_refs]              # (s_max, 1) int32 output (VMEM)
    gen_oh_ref = rest[n_layer_refs + 1]       # (1, VOCAB) f32 scratch: last sampled one-hot
    caches = rest[n_layer_refs + 2:]          # per layer: kc_real, kc_imag, vc

    s_max = out_ref.shape[0]
    half = N_EMBD // 2
    scale = 1.0 / math.sqrt(HEAD_DIM)

    # -------------------- one-time init (runs once, no grid) --------------------
    out_ref[...] = prompt_ids_ref[...]        # prompt ids; generated rows overwritten below
    gen_oh_ref[...] = jnp.zeros_like(gen_oh_ref)
    for c in caches:
        c[...] = jnp.zeros_like(c)

    # loop-invariant iotas (hoisted out of the position loop)
    row_ids_h = jax.lax.broadcasted_iota(jnp.int32, (s_max, N_HEAD), 0)
    vocab_lane = jax.lax.broadcasted_iota(jnp.int32, (1, VOCAB), 1).astype(jnp.float32)

    def rmsnorm(v, w):
        ms = jnp.mean(v * v, axis=-1, keepdims=True)
        return v * jax.lax.rsqrt(ms + EPS) * w

    # ------------------- decode loop: one token per iteration -------------------
    @pl.loop(0, s_max - 1)
    def _step(pos):
        # current token one-hot: prompt row during prefill, previously sampled afterwards
        cur_oh = jnp.where(pos < prompt_len,
                           prompt_oh_ref[pl.ds(pos, 1), :],
                           gen_oh_ref[...])                                   # (1, V)
        x = jnp.dot(cur_oh, emb_ref[...], preferred_element_type=jnp.float32)  # (1, D)

        cos_row = cos_ref[pl.ds(pos, 1), :]                                   # (1, 16)
        sin_row = sin_ref[pl.ds(pos, 1), :]                                   # (1, 16)

        for l in range(N_LAYER):
            rms1, wqkv, wo, rms2, w13, w2 = \
                layer_refs[_PER_LAYER_REFS * l: _PER_LAYER_REFS * (l + 1)]
            kcr, kci, vc = caches[3 * l], caches[3 * l + 1], caches[3 * l + 2]

            h1 = rmsnorm(x, rms1[...])
            # packed projection, columns: [q_real | q_imag | k_real | k_imag | v]
            qkv = jnp.dot(h1, wqkv[...], preferred_element_type=jnp.float32)  # (1, 96)
            qr = qkv[:, 0 * half:1 * half]
            qi = qkv[:, 1 * half:2 * half]
            kr = qkv[:, 2 * half:3 * half]
            ki = qkv[:, 3 * half:4 * half]
            v = qkv[:, 4 * half:6 * half]                                     # (1, 32)

            # interleaved (complex) RoPE in de-interleaved layout: pure element-wise
            qrr = qr * cos_row - qi * sin_row
            qri = qi * cos_row + qr * sin_row
            krr = kr * cos_row - ki * sin_row
            kri = ki * cos_row + kr * sin_row

            # O(1) KV-cache append: single-row dynamic sublane stores
            kcr[pl.ds(pos, 1), :] = krr
            kci[pl.ds(pos, 1), :] = kri
            vc[pl.ds(pos, 1), :] = v

            # attention over cached rows 0..pos
            prod = kcr[...] * qrr + kci[...] * qri                            # (S, 16)
            scores = jnp.dot(prod, gmat_ref[...],
                             preferred_element_type=jnp.float32) * scale      # (S, H)
            masked = jnp.where(row_ids_h <= pos, scores, NEG_INF)
            m = jnp.max(masked, axis=0, keepdims=True)
            e = jnp.exp(masked - m)
            p = e / jnp.sum(e, axis=0, keepdims=True)                         # (S, H)
            p_full = jnp.dot(p, gmat_t_ref[...],
                             preferred_element_type=jnp.float32)              # (S, D)
            attn = jnp.sum(p_full * vc[...], axis=0, keepdims=True)           # (1, D)
            x = x + jnp.dot(attn, wo[...], preferred_element_type=jnp.float32)

            # SwiGLU MLP with fused (w1|w3) up-projection
            h2 = rmsnorm(x, rms2[...])
            ab = jnp.dot(h2, w13[...], preferred_element_type=jnp.float32)    # (1, 2*Hd)
            a = ab[:, :N_HIDDEN]
            b = ab[:, N_HIDDEN:]
            x = x + jnp.dot(a * jax.nn.sigmoid(a) * b, w2[...],
                            preferred_element_type=jnp.float32)

        # sample next token only once the prompt has been consumed
        @pl.when(pos >= prompt_len - 1)
        def _sample():
            xf = rmsnorm(x, lnf_ref[...])
            logits = jnp.dot(xf, head_ref[...],
                             preferred_element_type=jnp.float32)              # (1, V)
            step = pos - (prompt_len - 1)
            g = gum_ref[pl.ds(step, 1), :]                                    # (1, V)
            z = logits * (1.0 / TEMPERATURE) + g    # Gumbel-max == multinomial sample
            zmax = jnp.max(z, axis=1, keepdims=True)
            cand = jnp.where(z >= zmax, vocab_lane, float(VOCAB))
            nxt_f = jnp.min(cand, axis=1, keepdims=True)                      # (1, 1)
            gen_oh_ref[...] = (vocab_lane == nxt_f).astype(jnp.float32)
            out_ref[pl.ds(pos + 1, 1), :] = nxt_f.astype(jnp.int32)


# ------------------------------ host-side glue ---------------------------------
def _build_rope_tables(s_max):
    """Per-position cos/sin over the 16 (head, freq) lanes of the de-interleaved layout."""
    theta = 1.0 / (10000.0 ** (jnp.arange(0, HEAD_DIM, 2, dtype=jnp.float32) / HEAD_DIM))
    posi = jnp.arange(s_max, dtype=jnp.float32)
    ang = jnp.outer(posi, theta)                               # (S, Dh/2)
    return jnp.tile(jnp.cos(ang), (1, N_HEAD)), jnp.tile(jnp.sin(ang), (1, N_HEAD))


def _split_perms():
    """Column permutations mapping interleaved q/k weights to [real | imag] lane layout."""
    j = jnp.arange(N_EMBD // 2)
    h = j // (HEAD_DIM // 2)
    r = j % (HEAD_DIM // 2)
    base = h * HEAD_DIM + 2 * r
    return base, base + 1


def init_params(key):
    def normal(k, shape, scale=0.02):
        return scale * jax.random.normal(k, shape, dtype=jnp.float32)

    keys = jax.random.split(key, 3 + 7 * N_LAYER)
    params = {
        "tok_emb": normal(keys[0], (VOCAB, N_EMBD)),
        "ln_f": jnp.ones((1, N_EMBD), jnp.float32),
        "lm_head": normal(keys[1], (N_EMBD, VOCAB)),
        "layers": [],
    }
    for l in range(N_LAYER):
        k = keys[3 + 7 * l: 3 + 7 * (l + 1)]
        params["layers"].append(
            {
                "rms1": jnp.ones((1, N_EMBD), jnp.float32),
                "wqkv": normal(k[0], (N_EMBD, 3 * N_EMBD)),
                "wo": normal(k[1], (N_EMBD, N_EMBD)),
                "rms2": jnp.ones((1, N_EMBD), jnp.float32),
                "w1": normal(k[2], (N_EMBD, N_HIDDEN)),
                "w3": normal(k[3], (N_EMBD, N_HIDDEN)),
                "w2": normal(k[4], (N_HIDDEN, N_EMBD)),
            }
        )
    return params


def generate(params, idx, max_new_tokens, sample_key):
    """Mirrors lit_llama.generate: append max_new_tokens sampled tokens to idx.

    The entire generation (KV-cached single-token forwards + multinomial sampling) runs
    inside ONE grid-less pallas_call with an in-kernel pl.loop over positions; all
    weights and caches stay resident in VMEM for the whole call.
    """
    T = idx.shape[0]
    s_max = T + max_new_tokens

    cos_tab, sin_tab = _build_rope_tables(s_max)

    # per-head indicator matmuls: (q/k de-interleaved lanes -> head), (head -> v lanes)
    gmat = (jnp.arange(N_EMBD // 2)[:, None] // (HEAD_DIM // 2)
            == jnp.arange(N_HEAD)[None, :]).astype(jnp.float32)               # (16, H)
    gmat_t = (jnp.arange(N_HEAD)[:, None]
              == jnp.arange(N_EMBD)[None, :] // HEAD_DIM).astype(jnp.float32)  # (H, D)

    gumbel = jax.random.gumbel(sample_key, (max_new_tokens, VOCAB), dtype=jnp.float32)

    tok_pad = jnp.zeros((s_max,), jnp.int32).at[:T].set(idx.astype(jnp.int32))
    valid = (jnp.arange(s_max) < T).astype(jnp.float32)
    prompt_oh = jax.nn.one_hot(tok_pad, VOCAB, dtype=jnp.float32) * valid[:, None]
    prompt_ids = tok_pad[:, None]                                             # (s_max, 1)

    perm_r, perm_i = _split_perms()
    inputs = [prompt_oh, prompt_ids, params["tok_emb"], cos_tab, sin_tab,
              gmat, gmat_t, gumbel, params["ln_f"], params["lm_head"]]
    for layer in params["layers"]:
        wq, wk, wv = jnp.split(layer["wqkv"], 3, axis=1)
        wqkv_packed = jnp.concatenate(
            [wq[:, perm_r], wq[:, perm_i], wk[:, perm_r], wk[:, perm_i], wv], axis=1)
        w13 = jnp.concatenate([layer["w1"], layer["w3"]], axis=1)             # (32, 128)
        inputs += [layer["rms1"], wqkv_packed, layer["wo"], layer["rms2"], w13,
                   layer["w2"]]

    scratch = [pltpu.VMEM((1, VOCAB), jnp.float32)]          # last sampled one-hot
    for _ in range(N_LAYER):
        scratch += [pltpu.VMEM((s_max, N_EMBD // 2), jnp.float32),   # K cache (real)
                    pltpu.VMEM((s_max, N_EMBD // 2), jnp.float32),   # K cache (imag)
                    pltpu.VMEM((s_max, N_EMBD), jnp.float32)]        # V cache

    kernel = functools.partial(_generate_kernel, prompt_len=T)
    vmem = pltpu.MemorySpace.VMEM
    out2d = pl.pallas_call(
        kernel,
        out_shape=jax.ShapeDtypeStruct((s_max, 1), jnp.int32),
        in_specs=[pl.BlockSpec(memory_space=vmem) for _ in inputs],
        out_specs=pl.BlockSpec(memory_space=vmem),
        scratch_shapes=scratch,
    )(*inputs)
    return out2d[:, 0]                                       # (T + max_new_tokens,)


# ------------------------------------ main -------------------------------------
if __name__ == "__main__":
    key = jax.random.PRNGKey(0)
    k_params, k_prompt, k_sample = jax.random.split(key, 3)

    params = init_params(k_params)

    T = 8                 # prompt length
    MAX_NEW_TOKENS = 8
    idx = jax.random.randint(k_prompt, (T,), 0, VOCAB, dtype=jnp.int32)

    gen = jax.jit(functools.partial(generate, max_new_tokens=MAX_NEW_TOKENS))
    out = gen(params, idx, sample_key=k_sample)
    out = jax.block_until_ready(out)

    assert out.shape == (T + MAX_NEW_TOKENS,)
    assert bool(jnp.all(out[:T] == idx))
    print("KERNEL_OK")
</pallas_src>

<mosaic_0001>
module attributes {stable_mosaic.version = 11 : i64} {
  func.func @_generate_kernel(%arg0: memref<16x256xf32, #tpu.memory_space<vmem>>, %arg1: memref<16x1xi32, #tpu.memory_space<vmem>>, %arg2: memref<256x32xf32, #tpu.memory_space<vmem>>, %arg3: memref<16x16xf32, #tpu.memory_space<vmem>>, %arg4: memref<16x16xf32, #tpu.memory_space<vmem>>, %arg5: memref<16x4xf32, #tpu.memory_space<vmem>>, %arg6: memref<4x32xf32, #tpu.memory_space<vmem>>, %arg7: memref<8x256xf32, #tpu.memory_space<vmem>>, %arg8: memref<1x32xf32, #tpu.memory_space<vmem>>, %arg9: memref<32x256xf32, #tpu.memory_space<vmem>>, %arg10: memref<1x32xf32, #tpu.memory_space<vmem>>, %arg11: memref<32x96xf32, #tpu.memory_space<vmem>>, %arg12: memref<32x32xf32, #tpu.memory_space<vmem>>, %arg13: memref<1x32xf32, #tpu.memory_space<vmem>>, %arg14: memref<32x128xf32, #tpu.memory_space<vmem>>, %arg15: memref<64x32xf32, #tpu.memory_space<vmem>>, %arg16: memref<1x32xf32, #tpu.memory_space<vmem>>, %arg17: memref<32x96xf32, #tpu.memory_space<vmem>>, %arg18: memref<32x32xf32, #tpu.memory_space<vmem>>, %arg19: memref<1x32xf32, #tpu.memory_space<vmem>>, %arg20: memref<32x128xf32, #tpu.memory_space<vmem>>, %arg21: memref<64x32xf32, #tpu.memory_space<vmem>>, %arg22: memref<16x1xi32, #tpu.memory_space<vmem>>, %arg23: memref<1x256xf32, #tpu.memory_space<vmem>>, %arg24: memref<16x16xf32, #tpu.memory_space<vmem>>, %arg25: memref<16x16xf32, #tpu.memory_space<vmem>>, %arg26: memref<16x32xf32, #tpu.memory_space<vmem>>, %arg27: memref<16x16xf32, #tpu.memory_space<vmem>>, %arg28: memref<16x16xf32, #tpu.memory_space<vmem>>, %arg29: memref<16x32xf32, #tpu.memory_space<vmem>>) attributes {dimension_semantics = [], scalar_prefetch = 0 : i64, scratch_operands = 7 : i64, tpu.core_type = #tpu.core_type<tc>} {
    %c0 = arith.constant 0 : index
    %c0_0 = arith.constant 0 : index
    %0 = vector.load %arg1[%c0, %c0_0] : memref<16x1xi32, #tpu.memory_space<vmem>>, vector<16x1xi32>
    %c0_1 = arith.constant 0 : index
    %c0_2 = arith.constant 0 : index
    %1 = vector.load %arg22[%c0_1, %c0_2] : memref<16x1xi32, #tpu.memory_space<vmem>>, vector<16x1xi32>
    tpu.vector_store %arg22[%c0_1, %c0_2], %0 {strides = array<i32>} : memref<16x1xi32, #tpu.memory_space<vmem>>, vector<16x1xi32>,
    %cst = arith.constant 0.000000e+00 : f32
    %2 = vector.broadcast %cst : f32 to vector<1x256xf32>
    %c0_3 = arith.constant 0 : index
    %c0_4 = arith.constant 0 : index
    %3 = vector.load %arg23[%c0_3, %c0_4] : memref<1x256xf32, #tpu.memory_space<vmem>>, vector<1x256xf32>
    tpu.vector_store %arg23[%c0_3, %c0_4], %2 {strides = array<i32>} : memref<1x256xf32, #tpu.memory_space<vmem>>, vector<1x256xf32>,
    %cst_5 = arith.constant 0.000000e+00 : f32
    %4 = vector.broadcast %cst_5 : f32 to vector<16x16xf32>
    %c0_6 = arith.constant 0 : index
    %c0_7 = arith.constant 0 : index
    %5 = vector.load %arg24[%c0_6, %c0_7] : memref<16x16xf32, #tpu.memory_space<vmem>>, vector<16x16xf32>
    tpu.vector_store %arg24[%c0_6, %c0_7], %4 {strides = array<i32>} : memref<16x16xf32, #tpu.memory_space<vmem>>, vector<16x16xf32>,
    %cst_8 = arith.constant 0.000000e+00 : f32
    %6 = vector.broadcast %cst_8 : f32 to vector<16x16xf32>
    %c0_9 = arith.constant 0 : index
    %c0_10 = arith.constant 0 : index
    %7 = vector.load %arg25[%c0_9, %c0_10] : memref<16x16xf32, #tpu.memory_space<vmem>>, vector<16x16xf32>
    tpu.vector_store %arg25[%c0_9, %c0_10], %6 {strides = array<i32>} : memref<16x16xf32, #tpu.memory_space<vmem>>, vector<16x16xf32>,
    %cst_11 = arith.constant 0.000000e+00 : f32
    %8 = vector.broadcast %cst_11 : f32 to vector<16x32xf32>
    %c0_12 = arith.constant 0 : index
    %c0_13 = arith.constant 0 : index
    %9 = vector.load %arg26[%c0_12, %c0_13] : memref<16x32xf32, #tpu.memory_space<vmem>>, vector<16x32xf32>
    tpu.vector_store %arg26[%c0_12, %c0_13], %8 {strides = array<i32>} : memref<16x32xf32, #tpu.memory_space<vmem>>, vector<16x32xf32>,
    %cst_14 = arith.constant 0.000000e+00 : f32
    %10 = vector.broadcast %cst_14 : f32 to vector<16x16xf32>
    %c0_15 = arith.constant 0 : index
    %c0_16 = arith.constant 0 : index
    %11 = vector.load %arg27[%c0_15, %c0_16] : memref<16x16xf32, #tpu.memory_space<vmem>>, vector<16x16xf32>
    tpu.vector_store %arg27[%c0_15, %c0_16], %10 {strides = array<i32>} : memref<16x16xf32, #tpu.memory_space<vmem>>, vector<16x16xf32>,
    %cst_17 = arith.constant 0.000000e+00 : f32
    %12 = vector.broadcast %cst_17 : f32 to vector<16x16xf32>
    %c0_18 = arith.constant 0 : index
    %c0_19 = arith.constant 0 : index
    %13 = vector.load %arg28[%c0_18, %c0_19] : memref<16x16xf32, #tpu.memory_space<vmem>>, vector<16x16xf32>
    tpu.vector_store %arg28[%c0_18, %c0_19], %12 {strides = array<i32>} : memref<16x16xf32, #tpu.memory_space<vmem>>, vector<16x16xf32>,
    %cst_20 = arith.constant 0.000000e+00 : f32
    %14 = vector.broadcast %cst_20 : f32 to vector<16x32xf32>
    %c0_21 = arith.constant 0 : index
    %c0_22 = arith.constant 0 : index
    %15 = vector.load %arg29[%c0_21, %c0_22] : memref<16x32xf32, #tpu.memory_space<vmem>>, vector<16x32xf32>
    tpu.vector_store %arg29[%c0_21, %c0_22], %14 {strides = array<i32>} : memref<16x32xf32, #tpu.memory_space<vmem>>, vector<16x32xf32>,
    %16 = tpu.iota {dimensions = array<i32: 0>} : vector<16x4xi32>
    %17 = tpu.iota {dimensions = array<i32: 1>} : vector<1x256xi32>
    %18 = arith.sitofp %17 : vector<1x256xi32> to vector<1x256xf32>
    %c0_i32 = arith.constant 0 : i32
    %c15_i32 = arith.constant 15 : i32
    %19 = arith.addi %c0_i32, %c15_i32 : i32
    %c1_i32 = arith.constant 1 : i32
    scf.for %arg30 = %c0_i32 to %19 step %c1_i32  : i32 {
      %c1_i32_24 = arith.constant 1 : i32
      %20 = arith.muli %arg30, %c1_i32_24 : i32
      %c0_i32_25 = arith.constant 0 : i32
      %21 = arith.addi %c0_i32_25, %20 : i32
      %c8_i32 = arith.constant 8 : i32
      %22 = arith.cmpi slt, %21, %c8_i32 : i32
      %23 = arith.index_cast %21 : i32 to index
      %c0_26 = arith.constant 0 : index
      %24 = vector.load %arg0[%23, %c0_26] : memref<16x256xf32, #tpu.memory_space<vmem>>, vector<1x256xf32>
      %c0_27 = arith.constant 0 : index
      %c0_28 = arith.constant 0 : index
      %25 = vector.load %arg23[%c0_27, %c0_28] : memref<1x256xf32, #tpu.memory_space<vmem>>, vector<1x256xf32>
      %26 = arith.select %22, %24, %25 : vector<1x256xf32>
      %c0_29 = arith.constant 0 : index
      %c0_30 = arith.constant 0 : index
      %27 = vector.load %arg2[%c0_29, %c0_30] : memref<256x32xf32, #tpu.memory_space<vmem>>, vector<256x32xf32>
      %cst_31 = arith.constant dense<0.000000e+00> : vector<1x32xf32>
      %28 = tpu.matmul %26, %27, %cst_31 {dimension_numbers = #tpu.dot_dimension_numbers<[1], [0], [0], [1], [0, 0, 1, 1], [], []>} : vector<1x256xf32>, vector<256x32xf32>, vector<1x32xf32> -> vector<1x32xf32>
      %29 = arith.index_cast %21 : i32 to index
      %c0_32 = arith.constant 0 : index
      %30 = vector.load %arg3[%29, %c0_32] : memref<16x16xf32, #tpu.memory_space<vmem>>, vector<1x16xf32>
      %31 = arith.index_cast %21 : i32 to index
      %c0_33 = arith.constant 0 : index
      %32 = vector.load %arg4[%31, %c0_33] : memref<16x16xf32, #tpu.memory_space<vmem>>, vector<1x16xf32>
      %c0_34 = arith.constant 0 : index
      %c0_35 = arith.constant 0 : index
      %33 = vector.load %arg10[%c0_34, %c0_35] : memref<1x32xf32, #tpu.memory_space<vmem>>, vector<1x32xf32>
      %34 = arith.mulf %28, %28 : vector<1x32xf32>
      %cst_36 = arith.constant dense<0.000000e+00> : vector<1xf32>
      %35 = vector.multi_reduction <add>, %34, %cst_36 [1] : vector<1x32xf32> to vector<1xf32>
      %36 = vector.shape_cast %35 : vector<1xf32> to vector<1x1xf32>
      %cst_37 = arith.constant 3.200000e+01 : f32
      %37 = vector.broadcast %cst_37 : f32 to vector<1x1xf32>
      %38 = arith.divf %36, %37 : vector<1x1xf32>
      %cst_38 = arith.constant 9.99999974E-6 : f32
      %39 = vector.broadcast %cst_38 : f32 to vector<1x1xf32>
      %40 = arith.addf %38, %39 : vector<1x1xf32>
      %41 = math.rsqrt %40 : vector<1x1xf32>
      %42 = vector.broadcast %41 : vector<1x1xf32> to vector<1x32xf32>
      %43 = arith.mulf %28, %42 : vector<1x32xf32>
      %44 = arith.mulf %43, %33 : vector<1x32xf32>
      %c0_39 = arith.constant 0 : index
      %c0_40 = arith.constant 0 : index
      %45 = vector.load %arg11[%c0_39, %c0_40] : memref<32x96xf32, #tpu.memory_space<vmem>>, vector<32x96xf32>
      %cst_41 = arith.constant dense<0.000000e+00> : vector<1x96xf32>
      %46 = tpu.matmul %44, %45, %cst_41 {dimension_numbers = #tpu.dot_dimension_numbers<[1], [0], [0], [1], [0, 0, 1, 1], [], []>} : vector<1x32xf32>, vector<32x96xf32>, vector<1x96xf32> -> vector<1x96xf32>
      %47 = vector.extract_strided_slice %46 {offsets = [0, 0], sizes = [1, 16], strides = [1, 1]} : vector<1x96xf32> to vector<1x16xf32>
      %48 = vector.extract_strided_slice %46 {offsets = [0, 16], sizes = [1, 16], strides = [1, 1]} : vector<1x96xf32> to vector<1x16xf32>
      %49 = vector.extract_strided_slice %46 {offsets = [0, 32], sizes = [1, 16], strides = [1, 1]} : vector<1x96xf32> to vector<1x16xf32>
      %50 = vector.extract_strided_slice %46 {offsets = [0, 48], sizes = [1, 16], strides = [1, 1]} : vector<1x96xf32> to vector<1x16xf32>
      %51 = vector.extract_strided_slice %46 {offsets = [0, 64], sizes = [1, 32], strides = [1, 1]} : vector<1x96xf32> to vector<1x32xf32>
      %52 = arith.mulf %47, %30 : vector<1x16xf32>
      %53 = arith.mulf %48, %32 : vector<1x16xf32>
      %54 = arith.subf %52, %53 : vector<1x16xf32>
      %55 = arith.mulf %48, %30 : vector<1x16xf32>
      %56 = arith.mulf %47, %32 : vector<1x16xf32>
      %57 = arith.addf %55, %56 : vector<1x16xf32>
      %58 = arith.mulf %49, %30 : vector<1x16xf32>
      %59 = arith.mulf %50, %32 : vector<1x16xf32>
      %60 = arith.subf %58, %59 : vector<1x16xf32>
      %61 = arith.mulf %50, %30 : vector<1x16xf32>
      %62 = arith.mulf %49, %32 : vector<1x16xf32>
      %63 = arith.addf %61, %62 : vector<1x16xf32>
      %64 = arith.index_cast %21 : i32 to index
      %c0_42 = arith.constant 0 : index
      %65 = vector.load %arg24[%64, %c0_42] : memref<16x16xf32, #tpu.memory_space<vmem>>, vector<1x16xf32>
      tpu.vector_store %arg24[%64, %c0_42], %60 {strides = array<i32>} : memref<16x16xf32, #tpu.memory_space<vmem>>, vector<1x16xf32>,
      %66 = arith.index_cast %21 : i32 to index
      %c0_43 = arith.constant 0 : index
      %67 = vector.load %arg25[%66, %c0_43] : memref<16x16xf32, #tpu.memory_space<vmem>>, vector<1x16xf32>
      tpu.vector_store %arg25[%66, %c0_43], %63 {strides = array<i32>} : memref<16x16xf32, #tpu.memory_space<vmem>>, vector<1x16xf32>,
      %68 = arith.index_cast %21 : i32 to index
      %c0_44 = arith.constant 0 : index
      %69 = vector.load %arg26[%68, %c0_44] : memref<16x32xf32, #tpu.memory_space<vmem>>, vector<1x32xf32>
      tpu.vector_store %arg26[%68, %c0_44], %51 {strides = array<i32>} : memref<16x32xf32, #tpu.memory_space<vmem>>, vector<1x32xf32>,
      %c0_45 = arith.constant 0 : index
      %c0_46 = arith.constant 0 : index
      %70 = vector.load %arg24[%c0_45, %c0_46] : memref<16x16xf32, #tpu.memory_space<vmem>>, vector<16x16xf32>
      %71 = vector.broadcast %54 : vector<1x16xf32> to vector<16x16xf32>
      %72 = arith.mulf %70, %71 : vector<16x16xf32>
      %c0_47 = arith.constant 0 : index
      %c0_48 = arith.constant 0 : index
      %73 = vector.load %arg25[%c0_47, %c0_48] : memref<16x16xf32, #tpu.memory_space<vmem>>, vector<16x16xf32>
      %74 = vector.broadcast %57 : vector<1x16xf32> to vector<16x16xf32>
      %75 = arith.mulf %73, %74 : vector<16x16xf32>
      %76 = arith.addf %72, %75 : vector<16x16xf32>
      %c0_49 = arith.constant 0 : index
      %c0_50 = arith.constant 0 : index
      %77 = vector.load %arg5[%c0_49, %c0_50] : memref<16x4xf32, #tpu.memory_space<vmem>>, vector<16x4xf32>
      %cst_51 = arith.constant dense<0.000000e+00> : vector<16x4xf32>
      %78 = tpu.matmul %76, %77, %cst_51 {dimension_numbers = #tpu.dot_dimension_numbers<[1], [0], [0], [1], [0, 0, 1, 1], [], []>} : vector<16x16xf32>, vector<16x4xf32>, vector<16x4xf32> -> vector<16x4xf32>
      %cst_52 = arith.constant 0.353553385 : f32
      %79 = vector.broadcast %cst_52 : f32 to vector<16x4xf32>
      %80 = arith.mulf %78, %79 : vector<16x4xf32>
      %81 = vector.broadcast %21 : i32 to vector<16x4xi32>
      %82 = arith.cmpi sle, %16, %81 : vector<16x4xi32>
      %cst_53 = arith.constant -1.000000e+30 : f32
      %83 = vector.broadcast %cst_53 : f32 to vector<16x4xf32>
      %84 = arith.select %82, %80, %83 : vector<16x4xi1>, vector<16x4xf32>
      %cst_54 = arith.constant dense<0xFF800000> : vector<4xf32>
      %85 = vector.multi_reduction <maximumf>, %84, %cst_54 [0] : vector<16x4xf32> to vector<4xf32>
      %86 = vector.shape_cast %85 : vector<4xf32> to vector<1x4xf32>
      %87 = vector.broadcast %86 : vector<1x4xf32> to vector<16x4xf32>
      %88 = arith.subf %84, %87 : vector<16x4xf32>
      %89 = math.exp %88 : vector<16x4xf32>
      %cst_55 = arith.constant dense<0.000000e+00> : vector<4xf32>
      %90 = vector.multi_reduction <add>, %89, %cst_55 [0] : vector<16x4xf32> to vector<4xf32>
      %91 = vector.shape_cast %90 : vector<4xf32> to vector<1x4xf32>
      %92 = vector.broadcast %91 : vector<1x4xf32> to vector<16x4xf32>
      %93 = arith.divf %89, %92 : vector<16x4xf32>
      %c0_56 = arith.constant 0 : index
      %c0_57 = arith.constant 0 : index
      %94 = vector.load %arg6[%c0_56, %c0_57] : memref<4x32xf32, #tpu.memory_space<vmem>>, vector<4x32xf32>
      %cst_58 = arith.constant dense<0.000000e+00> : vector<16x32xf32>
      %95 = tpu.matmul %93, %94, %cst_58 {dimension_numbers = #tpu.dot_dimension_numbers<[1], [0], [0], [1], [0, 0, 1, 1], [], []>} : vector<16x4xf32>, vector<4x32xf32>, vector<16x32xf32> -> vector<16x32xf32>
      %c0_59 = arith.constant 0 : index
      %c0_60 = arith.constant 0 : index
      %96 = vector.load %arg26[%c0_59, %c0_60] : memref<16x32xf32, #tpu.memory_space<vmem>>, vector<16x32xf32>
      %97 = arith.mulf %95, %96 : vector<16x32xf32>
      %cst_61 = arith.constant dense<0.000000e+00> : vector<32xf32>
      %98 = vector.multi_reduction <add>, %97, %cst_61 [0] : vector<16x32xf32> to vector<32xf32>
      %99 = vector.shape_cast %98 : vector<32xf32> to vector<1x32xf32>
      %c0_62 = arith.constant 0 : index
      %c0_63 = arith.constant 0 : index
      %100 = vector.load %arg12[%c0_62, %c0_63] : memref<32x32xf32, #tpu.memory_space<vmem>>, vector<32x32xf32>
      %cst_64 = arith.constant dense<0.000000e+00> : vector<1x32xf32>
      %101 = tpu.matmul %99, %100, %cst_64 {dimension_numbers = #tpu.dot_dimension_numbers<[1], [0], [0], [1], [0, 0, 1, 1], [], []>} : vector<1x32xf32>, vector<32x32xf32>, vector<1x32xf32> -> vector<1x32xf32>
      %102 = arith.addf %28, %101 : vector<1x32xf32>
      %c0_65 = arith.constant 0 : index
      %c0_66 = arith.constant 0 : index
      %103 = vector.load %arg13[%c0_65, %c0_66] : memref<1x32xf32, #tpu.memory_space<vmem>>, vector<1x32xf32>
      %104 = arith.mulf %102, %102 : vector<1x32xf32>
      %cst_67 = arith.constant dense<0.000000e+00> : vector<1xf32>
      %105 = vector.multi_reduction <add>, %104, %cst_67 [1] : vector<1x32xf32> to vector<1xf32>
      %106 = vector.shape_cast %105 : vector<1xf32> to vector<1x1xf32>
      %cst_68 = arith.constant 3.200000e+01 : f32
      %107 = vector.broadcast %cst_68 : f32 to vector<1x1xf32>
      %108 = arith.divf %106, %107 : vector<1x1xf32>
      %cst_69 = arith.constant 9.99999974E-6 : f32
      %109 = vector.broadcast %cst_69 : f32 to vector<1x1xf32>
      %110 = arith.addf %108, %109 : vector<1x1xf32>
      %111 = math.rsqrt %110 : vector<1x1xf32>
      %112 = vector.broadcast %111 : vector<1x1xf32> to vector<1x32xf32>
      %113 = arith.mulf %102, %112 : vector<1x32xf32>
      %114 = arith.mulf %113, %103 : vector<1x32xf32>
      %c0_70 = arith.constant 0 : index
      %c0_71 = arith.constant 0 : index
      %115 = vector.load %arg14[%c0_70, %c0_71] : memref<32x128xf32, #tpu.memory_space<vmem>>, vector<32x128xf32>
      %cst_72 = arith.constant dense<0.000000e+00> : vector<1x128xf32>
      %116 = tpu.matmul %114, %115, %cst_72 {dimension_numbers = #tpu.dot_dimension_numbers<[1], [0], [0], [1], [0, 0, 1, 1], [], []>} : vector<1x32xf32>, vector<32x128xf32>, vector<1x128xf32> -> vector<1x128xf32>
      %117 = vector.extract_strided_slice %116 {offsets = [0, 0], sizes = [1, 64], strides = [1, 1]} : vector<1x128xf32> to vector<1x64xf32>
      %118 = vector.extract_strided_slice %116 {offsets = [0, 64], sizes = [1, 64], strides = [1, 1]} : vector<1x128xf32> to vector<1x64xf32>
      %119 = arith.negf %117 : vector<1x64xf32>
      %120 = math.exp %119 : vector<1x64xf32>
      %cst_73 = arith.constant 1.000000e+00 : f32
      %121 = vector.broadcast %cst_73 : f32 to vector<1x64xf32>
      %122 = arith.addf %121, %120 : vector<1x64xf32>
      %123 = arith.divf %121, %122 : vector<1x64xf32>
      %124 = arith.mulf %117, %123 : vector<1x64xf32>
      %125 = arith.mulf %124, %118 : vector<1x64xf32>
      %c0_74 = arith.constant 0 : index
      %c0_75 = arith.constant 0 : index
      %126 = vector.load %arg15[%c0_74, %c0_75] : memref<64x32xf32, #tpu.memory_space<vmem>>, vector<64x32xf32>
      %cst_76 = arith.constant dense<0.000000e+00> : vector<1x32xf32>
      %127 = tpu.matmul %125, %126, %cst_76 {dimension_numbers = #tpu.dot_dimension_numbers<[1], [0], [0], [1], [0, 0, 1, 1], [], []>} : vector<1x64xf32>, vector<64x32xf32>, vector<1x32xf32> -> vector<1x32xf32>
      %128 = arith.addf %102, %127 : vector<1x32xf32>
      %c0_77 = arith.constant 0 : index
      %c0_78 = arith.constant 0 : index
      %129 = vector.load %arg16[%c0_77, %c0_78] : memref<1x32xf32, #tpu.memory_space<vmem>>, vector<1x32xf32>
      %130 = arith.mulf %128, %128 : vector<1x32xf32>
      %cst_79 = arith.constant dense<0.000000e+00> : vector<1xf32>
      %131 = vector.multi_reduction <add>, %130, %cst_79 [1] : vector<1x32xf32> to vector<1xf32>
      %132 = vector.shape_cast %131 : vector<1xf32> to vector<1x1xf32>
      %cst_80 = arith.constant 3.200000e+01 : f32
      %133 = vector.broadcast %cst_80 : f32 to vector<1x1xf32>
      %134 = arith.divf %132, %133 : vector<1x1xf32>
      %cst_81 = arith.constant 9.99999974E-6 : f32
      %135 = vector.broadcast %cst_81 : f32 to vector<1x1xf32>
      %136 = arith.addf %134, %135 : vector<1x1xf32>
      %137 = math.rsqrt %136 : vector<1x1xf32>
      %138 = vector.broadcast %137 : vector<1x1xf32> to vector<1x32xf32>
      %139 = arith.mulf %128, %138 : vector<1x32xf32>
      %140 = arith.mulf %139, %129 : vector<1x32xf32>
      %c0_82 = arith.constant 0 : index
      %c0_83 = arith.constant 0 : index
      %141 = vector.load %arg17[%c0_82, %c0_83] : memref<32x96xf32, #tpu.memory_space<vmem>>, vector<32x96xf32>
      %cst_84 = arith.constant dense<0.000000e+00> : vector<1x96xf32>
      %142 = tpu.matmul %140, %141, %cst_84 {dimension_numbers = #tpu.dot_dimension_numbers<[1], [0], [0], [1], [0, 0, 1, 1], [], []>} : vector<1x32xf32>, vector<32x96xf32>, vector<1x96xf32> -> vector<1x96xf32>
      %143 = vector.extract_strided_slice %142 {offsets = [0, 0], sizes = [1, 16], strides = [1, 1]} : vector<1x96xf32> to vector<1x16xf32>
      %144 = vector.extract_strided_slice %142 {offsets = [0, 16], sizes = [1, 16], strides = [1, 1]} : vector<1x96xf32> to vector<1x16xf32>
      %145 = vector.extract_strided_slice %142 {offsets = [0, 32], sizes = [1, 16], strides = [1, 1]} : vector<1x96xf32> to vector<1x16xf32>
      %146 = vector.extract_strided_slice %142 {offsets = [0, 48], sizes = [1, 16], strides = [1, 1]} : vector<1x96xf32> to vector<1x16xf32>
      %147 = vector.extract_strided_slice %142 {offsets = [0, 64], sizes = [1, 32], strides = [1, 1]} : vector<1x96xf32> to vector<1x32xf32>
      %148 = arith.mulf %143, %30 : vector<1x16xf32>
      %149 = arith.mulf %144, %32 : vector<1x16xf32>
      %150 = arith.subf %148, %149 : vector<1x16xf32>
      %151 = arith.mulf %144, %30 : vector<1x16xf32>
      %152 = arith.mulf %143, %32 : vector<1x16xf32>
      %153 = arith.addf %151, %152 : vector<1x16xf32>
      %154 = arith.mulf %145, %30 : vector<1x16xf32>
      %155 = arith.mulf %146, %32 : vector<1x16xf32>
      %156 = arith.subf %154, %155 : vector<1x16xf32>
      %157 = arith.mulf %146, %30 : vector<1x16xf32>
      %158 = arith.mulf %145, %32 : vector<1x16xf32>
      %159 = arith.addf %157, %158 : vector<1x16xf32>
      %160 = arith.index_cast %21 : i32 to index
      %c0_85 = arith.constant 0 : index
      %161 = vector.load %arg27[%160, %c0_85] : memref<16x16xf32, #tpu.memory_space<vmem>>, vector<1x16xf32>
      tpu.vector_store %arg27[%160, %c0_85], %156 {strides = array<i32>} : memref<16x16xf32, #tpu.memory_space<vmem>>, vector<1x16xf32>,
      %162 = arith.index_cast %21 : i32 to index
      %c0_86 = arith.constant 0 : index
      %163 = vector.load %arg28[%162, %c0_86] : memref<16x16xf32, #tpu.memory_space<vmem>>, vector<1x16xf32>
      tpu.vector_store %arg28[%162, %c0_86], %159 {strides = array<i32>} : memref<16x16xf32, #tpu.memory_space<vmem>>, vector<1x16xf32>,
      %164 = arith.index_cast %21 : i32 to index
      %c0_87 = arith.constant 0 : index
      %165 = vector.load %arg29[%164, %c0_87] : memref<16x32xf32, #tpu.memory_space<vmem>>, vector<1x32xf32>
      tpu.vector_store %arg29[%164, %c0_87], %147 {strides = array<i32>} : memref<16x32xf32, #tpu.memory_space<vmem>>, vector<1x32xf32>,
      %c0_88 = arith.constant 0 : index
      %c0_89 = arith.constant 0 : index
      %166 = vector.load %arg27[%c0_88, %c0_89] : memref<16x16xf32, #tpu.memory_space<vmem>>, vector<16x16xf32>
      %167 = vector.broadcast %150 : vector<1x16xf32> to vector<16x16xf32>
      %168 = arith.mulf %166, %167 : vector<16x16xf32>
      %c0_90 = arith.constant 0 : index
      %c0_91 = arith.constant 0 : index
      %169 = vector.load %arg28[%c0_90, %c0_91] : memref<16x16xf32, #tpu.memory_space<vmem>>, vector<16x16xf32>
      %170 = vector.broadcast %153 : vector<1x16xf32> to vector<16x16xf32>
      %171 = arith.mulf %169, %170 : vector<16x16xf32>
      %172 = arith.addf %168, %171 : vector<16x16xf32>
      %c0_92 = arith.constant 0 : index
      %c0_93 = arith.constant 0 : index
      %173 = vector.load %arg5[%c0_92, %c0_93] : memref<16x4xf32, #tpu.memory_space<vmem>>, vector<16x4xf32>
      %cst_94 = arith.constant dense<0.000000e+00> : vector<16x4xf32>
      %174 = tpu.matmul %172, %173, %cst_94 {dimension_numbers = #tpu.dot_dimension_numbers<[1], [0], [0], [1], [0, 0, 1, 1], [], []>} : vector<16x16xf32>, vector<16x4xf32>, vector<16x4xf32> -> vector<16x4xf32>
      %cst_95 = arith.constant 0.353553385 : f32
      %175 = vector.broadcast %cst_95 : f32 to vector<16x4xf32>
      %176 = arith.mulf %174, %175 : vector<16x4xf32>
      %177 = vector.broadcast %21 : i32 to vector<16x4xi32>
      %178 = arith.cmpi sle, %16, %177 : vector<16x4xi32>
      %cst_96 = arith.constant -1.000000e+30 : f32
      %179 = vector.broadcast %cst_96 : f32 to vector<16x4xf32>
      %180 = arith.select %178, %176, %179 : vector<16x4xi1>, vector<16x4xf32>
      %cst_97 = arith.constant dense<0xFF800000> : vector<4xf32>
      %181 = vector.multi_reduction <maximumf>, %180, %cst_97 [0] : vector<16x4xf32> to vector<4xf32>
      %182 = vector.shape_cast %181 : vector<4xf32> to vector<1x4xf32>
      %183 = vector.broadcast %182 : vector<1x4xf32> to vector<16x4xf32>
      %184 = arith.subf %180, %183 : vector<16x4xf32>
      %185 = math.exp %184 : vector<16x4xf32>
      %cst_98 = arith.constant dense<0.000000e+00> : vector<4xf32>
      %186 = vector.multi_reduction <add>, %185, %cst_98 [0] : vector<16x4xf32> to vector<4xf32>
      %187 = vector.shape_cast %186 : vector<4xf32> to vector<1x4xf32>
      %188 = vector.broadcast %187 : vector<1x4xf32> to vector<16x4xf32>
      %189 = arith.divf %185, %188 : vector<16x4xf32>
      %c0_99 = arith.constant 0 : index
      %c0_100 = arith.constant 0 : index
      %190 = vector.load %arg6[%c0_99, %c0_100] : memref<4x32xf32, #tpu.memory_space<vmem>>, vector<4x32xf32>
      %cst_101 = arith.constant dense<0.000000e+00> : vector<16x32xf32>
      %191 = tpu.matmul %189, %190, %cst_101 {dimension_numbers = #tpu.dot_dimension_numbers<[1], [0], [0], [1], [0, 0, 1, 1], [], []>} : vector<16x4xf32>, vector<4x32xf32>, vector<16x32xf32> -> vector<16x32xf32>
      %c0_102 = arith.constant 0 : index
      %c0_103 = arith.constant 0 : index
      %192 = vector.load %arg29[%c0_102, %c0_103] : memref<16x32xf32, #tpu.memory_space<vmem>>, vector<16x32xf32>
      %193 = arith.mulf %191, %192 : vector<16x32xf32>
      %cst_104 = arith.constant dense<0.000000e+00> : vector<32xf32>
      %194 = vector.multi_reduction <add>, %193, %cst_104 [0] : vector<16x32xf32> to vector<32xf32>
      %195 = vector.shape_cast %194 : vector<32xf32> to vector<1x32xf32>
      %c0_105 = arith.constant 0 : index
      %c0_106 = arith.constant 0 : index
      %196 = vector.load %arg18[%c0_105, %c0_106] : memref<32x32xf32, #tpu.memory_space<vmem>>, vector<32x32xf32>
      %cst_107 = arith.constant dense<0.000000e+00> : vector<1x32xf32>
      %197 = tpu.matmul %195, %196, %cst_107 {dimension_numbers = #tpu.dot_dimension_numbers<[1], [0], [0], [1], [0, 0, 1, 1], [], []>} : vector<1x32xf32>, vector<32x32xf32>, vector<1x32xf32> -> vector<1x32xf32>
      %198 = arith.addf %128, %197 : vector<1x32xf32>
      %c0_108 = arith.constant 0 : index
      %c0_109 = arith.constant 0 : index
      %199 = vector.load %arg19[%c0_108, %c0_109] : memref<1x32xf32, #tpu.memory_space<vmem>>, vector<1x32xf32>
      %200 = arith.mulf %198, %198 : vector<1x32xf32>
      %cst_110 = arith.constant dense<0.000000e+00> : vector<1xf32>
      %201 = vector.multi_reduction <add>, %200, %cst_110 [1] : vector<1x32xf32> to vector<1xf32>
      %202 = vector.shape_cast %201 : vector<1xf32> to vector<1x1xf32>
      %cst_111 = arith.constant 3.200000e+01 : f32
      %203 = vector.broadcast %cst_111 : f32 to vector<1x1xf32>
      %204 = arith.divf %202, %203 : vector<1x1xf32>
      %cst_112 = arith.constant 9.99999974E-6 : f32
      %205 = vector.broadcast %cst_112 : f32 to vector<1x1xf32>
      %206 = arith.addf %204, %205 : vector<1x1xf32>
      %207 = math.rsqrt %206 : vector<1x1xf32>
      %208 = vector.broadcast %207 : vector<1x1xf32> to vector<1x32xf32>
      %209 = arith.mulf %198, %208 : vector<1x32xf32>
      %210 = arith.mulf %209, %199 : vector<1x32xf32>
      %c0_113 = arith.constant 0 : index
      %c0_114 = arith.constant 0 : index
      %211 = vector.load %arg20[%c0_113, %c0_114] : memref<32x128xf32, #tpu.memory_space<vmem>>, vector<32x128xf32>
      %cst_115 = arith.constant dense<0.000000e+00> : vector<1x128xf32>
      %212 = tpu.matmul %210, %211, %cst_115 {dimension_numbers = #tpu.dot_dimension_numbers<[1], [0], [0], [1], [0, 0, 1, 1], [], []>} : vector<1x32xf32>, vector<32x128xf32>, vector<1x128xf32> -> vector<1x128xf32>
      %213 = vector.extract_strided_slice %212 {offsets = [0, 0], sizes = [1, 64], strides = [1, 1]} : vector<1x128xf32> to vector<1x64xf32>
      %214 = vector.extract_strided_slice %212 {offsets = [0, 64], sizes = [1, 64], strides = [1, 1]} : vector<1x128xf32> to vector<1x64xf32>
      %215 = arith.negf %213 : vector<1x64xf32>
      %216 = math.exp %215 : vector<1x64xf32>
      %cst_116 = arith.constant 1.000000e+00 : f32
      %217 = vector.broadcast %cst_116 : f32 to vector<1x64xf32>
      %218 = arith.addf %217, %216 : vector<1x64xf32>
      %219 = arith.divf %217, %218 : vector<1x64xf32>
      %220 = arith.mulf %213, %219 : vector<1x64xf32>
      %221 = arith.mulf %220, %214 : vector<1x64xf32>
      %c0_117 = arith.constant 0 : index
      %c0_118 = arith.constant 0 : index
      %222 = vector.load %arg21[%c0_117, %c0_118] : memref<64x32xf32, #tpu.memory_space<vmem>>, vector<64x32xf32>
      %cst_119 = arith.constant dense<0.000000e+00> : vector<1x32xf32>
      %223 = tpu.matmul %221, %222, %cst_119 {dimension_numbers = #tpu.dot_dimension_numbers<[1], [0], [0], [1], [0, 0, 1, 1], [], []>} : vector<1x64xf32>, vector<64x32xf32>, vector<1x32xf32> -> vector<1x32xf32>
      %224 = arith.addf %198, %223 : vector<1x32xf32>
      %c7_i32 = arith.constant 7 : i32
      %225 = arith.cmpi sge, %21, %c7_i32 : i32
      %226 = arith.extui %225 : i1 to i32
      %c0_i32_120 = arith.constant 0 : i32
      %227 = arith.cmpi ne, %226, %c0_i32_120 : i32
      scf.if %227 {
        %c0_121 = arith.constant 0 : index
        %c0_122 = arith.constant 0 : index
        %228 = vector.load %arg8[%c0_121, %c0_122] : memref<1x32xf32, #tpu.memory_space<vmem>>, vector<1x32xf32>
        %229 = arith.mulf %224, %224 : vector<1x32xf32>
        %cst_123 = arith.constant dense<0.000000e+00> : vector<1xf32>
        %230 = vector.multi_reduction <add>, %229, %cst_123 [1] : vector<1x32xf32> to vector<1xf32>
        %231 = vector.shape_cast %230 : vector<1xf32> to vector<1x1xf32>
        %cst_124 = arith.constant 3.200000e+01 : f32
        %232 = vector.broadcast %cst_124 : f32 to vector<1x1xf32>
        %233 = arith.divf %231, %232 : vector<1x1xf32>
        %cst_125 = arith.constant 9.99999974E-6 : f32
        %234 = vector.broadcast %cst_125 : f32 to vector<1x1xf32>
        %235 = arith.addf %233, %234 : vector<1x1xf32>
        %236 = math.rsqrt %235 : vector<1x1xf32>
        %237 = vector.broadcast %236 : vector<1x1xf32> to vector<1x32xf32>
        %238 = arith.mulf %224, %237 : vector<1x32xf32>
        %239 = arith.mulf %238, %228 : vector<1x32xf32>
        %c0_126 = arith.constant 0 : index
        %c0_127 = arith.constant 0 : index
        %240 = vector.load %arg9[%c0_126, %c0_127] : memref<32x256xf32, #tpu.memory_space<vmem>>, vector<32x256xf32>
        %cst_128 = arith.constant dense<0.000000e+00> : vector<1x256xf32>
        %241 = tpu.matmul %239, %240, %cst_128 {dimension_numbers = #tpu.dot_dimension_numbers<[1], [0], [0], [1], [0, 0, 1, 1], [], []>} : vector<1x32xf32>, vector<32x256xf32>, vector<1x256xf32> -> vector<1x256xf32>
        %c7_i32_129 = arith.constant 7 : i32
        %242 = arith.subi %21, %c7_i32_129 : i32
        %243 = arith.index_cast %242 : i32 to index
        %c0_130 = arith.constant 0 : index
        %244 = vector.load %arg7[%243, %c0_130] : memref<8x256xf32, #tpu.memory_space<vmem>>, vector<1x256xf32>
        %cst_131 = arith.constant 1.000000e+00 : f32
        %245 = vector.broadcast %cst_131 : f32 to vector<1x256xf32>
        %246 = arith.mulf %241, %245 : vector<1x256xf32>
        %247 = arith.addf %246, %244 : vector<1x256xf32>
        %cst_132 = arith.constant dense<0xFF800000> : vector<1xf32>
        %248 = vector.multi_reduction <maximumf>, %247, %cst_132 [1] : vector<1x256xf32> to vector<1xf32>
        %249 = vector.shape_cast %248 : vector<1xf32> to vector<1x1xf32>
        %250 = vector.broadcast %249 : vector<1x1xf32> to vector<1x256xf32>
        %251 = arith.cmpf oge, %247, %250 : vector<1x256xf32>
        %cst_133 = arith.constant 2.560000e+02 : f32
        %252 = vector.broadcast %cst_133 : f32 to vector<1x256xf32>
        %253 = arith.select %251, %18, %252 : vector<1x256xi1>, vector<1x256xf32>
        %cst_134 = arith.constant dense<0x7F800000> : vector<1xf32>
        %254 = vector.multi_reduction <minimumf>, %253, %cst_134 [1] : vector<1x256xf32> to vector<1xf32>
        %255 = vector.shape_cast %254 : vector<1xf32> to vector<1x1xf32>
        %256 = vector.broadcast %255 : vector<1x1xf32> to vector<1x256xf32>
        %257 = arith.cmpf oeq, %18, %256 : vector<1x256xf32>
        %258 = arith.extui %257 : vector<1x256xi1> to vector<1x256xi32>
        %259 = arith.sitofp %258 : vector<1x256xi32> to vector<1x256xf32>
        %c0_135 = arith.constant 0 : index
        %c0_136 = arith.constant 0 : index
        %260 = vector.load %arg23[%c0_135, %c0_136] : memref<1x256xf32, #tpu.memory_space<vmem>>, vector<1x256xf32>
        tpu.vector_store %arg23[%c0_135, %c0_136], %259 {strides = array<i32>} : memref<1x256xf32, #tpu.memory_space<vmem>>, vector<1x256xf32>,
        %261 = arith.fptosi %255 : vector<1x1xf32> to vector<1x1xi32>
        %c1_i32_137 = arith.constant 1 : i32
        %262 = arith.addi %21, %c1_i32_137 : i32
        %263 = arith.index_cast %262 : i32 to index
        %c0_138 = arith.constant 0 : index
        %264 = vector.load %arg22[%263, %c0_138] : memref<16x1xi32, #tpu.memory_space<vmem>>, vector<1x1xi32>
        tpu.vector_store %arg22[%263, %c0_138], %261 {strides = array<i32>} : memref<16x1xi32, #tpu.memory_space<vmem>>, vector<1x1xi32>,
      } else {
      }
    }
    %c15_i32_23 = arith.constant 15 : i32
    return
  }
}

</mosaic_0001>

<llo_original>
// kernel: generate.1
$region0: #{generate.1}
  #allocation0 [shape = 'u32[]', space=smem, size = 0x4, offset = 0x4, fixed_abs, tag = 'smem constant byte address 0x4 - core index']
  #allocation1 [shape = 'u32[144,128]{1,0:T(1,128)}', space=vmem, size = 0x12000, scoped, tag = 'internal scratch']
  #allocation2 [shape = 'f32[1,256]{1,0:T(1,128)}', space=vmem, size = 0x400, scoped, tag = 'scratch operand']
  #allocation3 [shape = 'f32[16,16]{1,0:T(8,128)}', space=vmem, size = 0x2000, scoped, tag = 'scratch operand']
  #allocation4 [shape = 'f32[16,16]{1,0:T(8,128)}', space=vmem, size = 0x2000, scoped, tag = 'scratch operand']
  #allocation5 [shape = 'f32[16,32]{1,0:T(8,128)}', space=vmem, size = 0x2000, scoped, tag = 'scratch operand']
  #allocation6 [shape = 'f32[16,16]{1,0:T(8,128)}', space=vmem, size = 0x2000, scoped, tag = 'scratch operand']
  #allocation7 [shape = 'f32[16,16]{1,0:T(8,128)}', space=vmem, size = 0x2000, scoped, tag = 'scratch operand']
  #allocation8 [shape = 'f32[16,32]{1,0:T(8,128)}', space=vmem, size = 0x2000, scoped, tag = 'scratch operand']
  %s0 = inlined_call_operand.vmem [shape: f32[16,256], index: 0, kind: input, shape index: {}]
  %s1 = inlined_call_operand.vmem [shape: s32[16,1], index: 1, kind: input, shape index: {}]
  %s2 = inlined_call_operand.vmem [shape: f32[256,32], index: 2, kind: input, shape index: {}]
  %s3 = inlined_call_operand.vmem [shape: f32[16,16], index: 3, kind: input, shape index: {}]
  %s4 = inlined_call_operand.vmem [shape: f32[16,16], index: 4, kind: input, shape index: {}]
  %s5 = inlined_call_operand.vmem [shape: f32[16,4], index: 5, kind: input, shape index: {}]
  %s6 = inlined_call_operand.vmem [shape: f32[4,32], index: 6, kind: input, shape index: {}]
  %s7 = inlined_call_operand.vmem [shape: f32[8,256], index: 7, kind: input, shape index: {}]
  %s8 = inlined_call_operand.vmem [shape: f32[1,32], index: 8, kind: input, shape index: {}]
  %s9 = inlined_call_operand.vmem [shape: f32[32,256], index: 9, kind: input, shape index: {}]
  %s10 = inlined_call_operand.vmem [shape: f32[1,32], index: 10, kind: input, shape index: {}]
  %s11 = inlined_call_operand.vmem [shape: f32[32,96], index: 11, kind: input, shape index: {}]
  %s12 = inlined_call_operand.vmem [shape: f32[32,32], index: 12, kind: input, shape index: {}]
  %s13 = inlined_call_operand.vmem [shape: f32[1,32], index: 13, kind: input, shape index: {}]
  %s14 = inlined_call_operand.vmem [shape: f32[32,128], index: 14, kind: input, shape index: {}]
  %s15 = inlined_call_operand.vmem [shape: f32[64,32], index: 15, kind: input, shape index: {}]
  %s16 = inlined_call_operand.vmem [shape: f32[1,32], index: 16, kind: input, shape index: {}]
  %s17 = inlined_call_operand.vmem [shape: f32[32,96], index: 17, kind: input, shape index: {}]
  %s18 = inlined_call_operand.vmem [shape: f32[32,32], index: 18, kind: input, shape index: {}]
  %s19 = inlined_call_operand.vmem [shape: f32[1,32], index: 19, kind: input, shape index: {}]
  %s20 = inlined_call_operand.vmem [shape: f32[32,128], index: 20, kind: input, shape index: {}]
  %s21 = inlined_call_operand.vmem [shape: f32[64,32], index: 21, kind: input, shape index: {}]
  %s22 = inlined_call_operand.vmem [shape: s32[16,1], index: 22, kind: output, shape index: {}]
  %s23 = sld [smem:[#allocation0]]
  $region109: #{generate.1} parent=0
    _
  %s25 = ssub.s32 1, %s23
  %s26 = scalar_select 0, %s25, %s23
  // Predicated region
  $region2: #{generate.1} parent=0 // pred_check
    _
  $region3: #{generate.1} parent=0 // pred_check_branch
    %28 = sbr.rel (0) target = $region5
  $region4: #{generate.1} parent=0 // pred_region
    _
  $region5: #{generate.1} parent=0 // pred_fallthru
    _
  // Predicated region
  $region6: #{generate.1} parent=0 // pred_check
    _
  $region7: #{generate.1} parent=0 // pred_check_branch
    %30 = sbr.rel (0) target = $region9
  $region8: #{generate.1} parent=0 // pred_region
    _
  $region9: #{generate.1} parent=0 // pred_fallthru
    _
  // Predicated region
  $region10: #{generate.1} parent=0 // pred_check
    _
  $region11: #{generate.1} parent=0 // pred_check_branch
    %32 = sbr.rel (0) target = $region13
  $region12: #{generate.1} parent=0 // pred_region
    _
  $region13: #{generate.1} parent=0 // pred_fallthru
    _
  // Predicated region
  $region14: #{generate.1} parent=0 // pred_check
    _
  $region15: #{generate.1} parent=0 // pred_check_branch
    %34 = sbr.rel (0) target = $region17
  $region16: #{generate.1} parent=0 // pred_region
    _
  $region17: #{generate.1} parent=0 // pred_fallthru
    _
  // Predicated region
  $region18: #{generate.1} parent=0 // pred_check
    _
  $region19: #{generate.1} parent=0 // pred_check_branch
    %36 = sbr.rel (0) target = $region21
  $region20: #{generate.1} parent=0 // pred_region
    _
  $region21: #{generate.1} parent=0 // pred_fallthru
    _
  // Predicated region
  $region22: #{generate.1} parent=0 // pred_check
    _
  $region23: #{generate.1} parent=0 // pred_check_branch
    %38 = sbr.rel (0) target = $region25
  $region24: #{generate.1} parent=0 // pred_region
    _
  $region25: #{generate.1} parent=0 // pred_fallthru
    _
  // Predicated region
  $region26: #{generate.1} parent=0 // pred_check
    _
  $region27: #{generate.1} parent=0 // pred_check_branch
    %40 = sbr.rel (0) target = $region29
  $region28: #{generate.1} parent=0 // pred_region
    _
  $region29: #{generate.1} parent=0 // pred_fallthru
    _
  // Predicated region
  $region30: #{generate.1} parent=0 // pred_check
    _
  $region31: #{generate.1} parent=0 // pred_check_branch
    %42 = sbr.rel (0) target = $region33
  $region32: #{generate.1} parent=0 // pred_region
    _
  $region33: #{generate.1} parent=0 // pred_fallthru
    _
  // Predicated region
  $region34: #{generate.1} parent=0 // pred_check
    _
  $region35: #{generate.1} parent=0 // pred_check_branch
    %44 = sbr.rel (0) target = $region37
  $region36: #{generate.1} parent=0 // pred_region
    _
  $region37: #{generate.1} parent=0 // pred_fallthru
    _
  // Predicated region
  $region38: #{generate.1} parent=0 // pred_check
    _
  $region39: #{generate.1} parent=0 // pred_check_branch
    %46 = sbr.rel (0) target = $region41
  $region40: #{generate.1} parent=0 // pred_region
    _
  $region41: #{generate.1} parent=0 // pred_fallthru
    _
  // Predicated region
  $region42: #{generate.1} parent=0 // pred_check
    _
  $region43: #{generate.1} parent=0 // pred_check_branch
    %48 = sbr.rel (0) target = $region45
  $region44: #{generate.1} parent=0 // pred_region
    _
  $region45: #{generate.1} parent=0 // pred_fallthru
    _
  // Predicated region
  $region46: #{generate.1} parent=0 // pred_check
    _
  $region47: #{generate.1} parent=0 // pred_check_branch
    %50 = sbr.rel (0) target = $region49
  $region48: #{generate.1} parent=0 // pred_region
    _
  $region49: #{generate.1} parent=0 // pred_fallthru
    _
  // Predicated region
  $region50: #{generate.1} parent=0 // pred_check
    _
  $region51: #{generate.1} parent=0 // pred_check_branch
    %52 = sbr.rel (0) target = $region53
  $region52: #{generate.1} parent=0 // pred_region
    _
  $region53: #{generate.1} parent=0 // pred_fallthru
    _
  // Predicated region
  $region54: #{generate.1} parent=0 // pred_check
    _
  $region55: #{generate.1} parent=0 // pred_check_branch
    %54 = sbr.rel (0) target = $region57
  $region56: #{generate.1} parent=0 // pred_region
    _
  $region57: #{generate.1} parent=0 // pred_fallthru
    _
  // Predicated region
  $region58: #{generate.1} parent=0 // pred_check
    _
  $region59: #{generate.1} parent=0 // pred_check_branch
    %56 = sbr.rel (0) target = $region61
  $region60: #{generate.1} parent=0 // pred_region
    _
  $region61: #{generate.1} parent=0 // pred_fallthru
    _
  // Predicated region
  $region62: #{generate.1} parent=0 // pred_check
    _
  $region63: #{generate.1} parent=0 // pred_check_branch
    %58 = sbr.rel (0) target = $region65
  $region64: #{generate.1} parent=0 // pred_region
    _
  $region65: #{generate.1} parent=0 // pred_fallthru
    _
  // Predicated region
  $region66: #{generate.1} parent=0 // pred_check
    _
  $region67: #{generate.1} parent=0 // pred_check_branch
    %60 = sbr.rel (0) target = $region69
  $region68: #{generate.1} parent=0 // pred_region
    _
  $region69: #{generate.1} parent=0 // pred_fallthru
    _
  // Predicated region
  $region70: #{generate.1} parent=0 // pred_check
    _
  $region71: #{generate.1} parent=0 // pred_check_branch
    %62 = sbr.rel (0) target = $region73
  $region72: #{generate.1} parent=0 // pred_region
    _
  $region73: #{generate.1} parent=0 // pred_fallthru
    _
  // Predicated region
  $region74: #{generate.1} parent=0 // pred_check
    _
  $region75: #{generate.1} parent=0 // pred_check_branch
    %64 = sbr.rel (0) target = $region77
  $region76: #{generate.1} parent=0 // pred_region
    _
  $region77: #{generate.1} parent=0 // pred_fallthru
    _
  // Predicated region
  $region78: #{generate.1} parent=0 // pred_check
    _
  $region79: #{generate.1} parent=0 // pred_check_branch
    %66 = sbr.rel (0) target = $region81
  $region80: #{generate.1} parent=0 // pred_region
    _
  $region81: #{generate.1} parent=0 // pred_fallthru
    _
  // Predicated region
  $region82: #{generate.1} parent=0 // pred_check
    _
  $region83: #{generate.1} parent=0 // pred_check_branch
    %68 = sbr.rel (0) target = $region85
  $region84: #{generate.1} parent=0 // pred_region
    _
  $region85: #{generate.1} parent=0 // pred_fallthru
    _
  // Predicated region
  $region86: #{generate.1} parent=0 // pred_check
    _
  $region87: #{generate.1} parent=0 // pred_check_branch
    %70 = sbr.rel (0) target = $region89
  $region88: #{generate.1} parent=0 // pred_region
    _
  $region89: #{generate.1} parent=0 // pred_fallthru
    _
  %v71 = vld [vmem:[%s1] sm:$0xff]
  %v72 = vld [vmem:[%s1 + $0x8] sm:$0xff]
  %vm73 = vcmask 7168
  %74 = vst.msk [vmem:[%s22] sm:$0xff] %vm73, %v71
  %75 = vst.msk [vmem:[%s22 + $0x8] sm:$0xff] %vm73, %v72
  %v76 = vlaneseq
  %vm77 = vcmp.ge.s32.totalorder %v76, 0
  %vm78 = vcmp.lt.s32.totalorder %v76, 256
  %vm79 = vmand %vm77, %vm78
  %80 = vst.msk [vmem:[#allocation2] sm:$0x3] %vm79, 0.0
  %vm81 = vcmask 130048
  %82 = vst.msk [vmem:[#allocation3] sm:$0xff] %vm81, 0.0
  %83 = vst.msk [vmem:[#allocation3 + $0x8] sm:$0xff] %vm81, 0.0
  %84 = vst.msk [vmem:[#allocation4] sm:$0xff] %vm81, 0.0
  %85 = vst.msk [vmem:[#allocation4 + $0x8] sm:$0xff] %vm81, 0.0
  %vm86 = vcmask 261120
  %87 = vst.msk [vmem:[#allocation5] sm:$0xff] %vm86, 0.0
  %88 = vst.msk [vmem:[#allocation5 + $0x8] sm:$0xff] %vm86, 0.0
  %89 = vst.msk [vmem:[#allocation6] sm:$0xff] %vm81, 0.0
  %90 = vst.msk [vmem:[#allocation6 + $0x8] sm:$0xff] %vm81, 0.0
  %91 = vst.msk [vmem:[#allocation7] sm:$0xff] %vm81, 0.0
  %92 = vst.msk [vmem:[#allocation7 + $0x8] sm:$0xff] %vm81, 0.0
  %93 = vst.msk [vmem:[#allocation8] sm:$0xff] %vm86, 0.0
  %94 = vst.msk [vmem:[#allocation8 + $0x8] sm:$0xff] %vm86, 0.0
  %v95 = vlaneseq
  %v96 = vshrl.u32 %v95, 7
  %v97 = vadd.s32 %v96, 8
  %v98 = vlaneseq
  %v99 = vand.u32 %v98, 127
  %v100 = vadd.s32 %v99, 128
  %v101 = vcvt.s32.f32 %v99
  %v102 = vcvt.s32.f32 %v100
  loop: start=0, step=1, limit=15
  $region90: #{generate.1} parent=0 // loop_pre_header
    _
  $region91: #{generate.1} parent=0 // loop_header
    %s104 = sphi 0, %s108
    %p105 = scmp.ge.s32.totalorder %s104, 15
  $region92: #{generate.1} parent=0 // loop_header_branch
    %107 = sbr.rel (%p105) target = $region96
  $region93: #{generate.1} parent=0 // loop_body
    %p109 = scmp.lt.s32.totalorder %s104, 8
    %s110 = sshra.s32 %s104, 3
    %s111 = sand.u32 %s104, 7
    %s112 = sshra.s32 %s104, 3
    %s113 = sand.u32 %s104, 7
    %s114 = smul.u32 %s110, 2
    %s115 = smul.u32 %s114, 8
    %s116 = sadd.s32 %s115, %s113
    %s117 = scalar_lea.vmem %s0, %s116
    %v118 = vld [vmem:[%s117] ss:$8 sm:$0x3]
    %v119 = vld [vmem:[#allocation2] sm:$0x3]
    %s120 = scalar_select %p109, 1, 0
    %v121 = vstv %s120
    %vm122 = vcmp.eq.s32.totalorder %v121, 1
    %v123 = vsel %vm122, %v118, %v119
    %v124 = vld [vmem:[%s2] sm:$0xff]
    %v125 = vld [vmem:[%s2 + $0x8] sm:$0xff]
    %v126 = vld [vmem:[%s2 + $0x10] sm:$0xff]
    %v127 = vld [vmem:[%s2 + $0x18] sm:$0xff]
    %v128 = vld [vmem:[%s2 + $0x20] sm:$0xff]
    %v129 = vld [vmem:[%s2 + $0x28] sm:$0xff]
    %v130 = vld [vmem:[%s2 + $0x30] sm:$0xff]
    %v131 = vld [vmem:[%s2 + $0x38] sm:$0xff]
    %v132 = vld [vmem:[%s2 + $0x40] sm:$0xff]
    %v133 = vld [vmem:[%s2 + $0x48] sm:$0xff]
    %v134 = vld [vmem:[%s2 + $0x50] sm:$0xff]
    %v135 = vld [vmem:[%s2 + $0x58] sm:$0xff]
    %v136 = vld [vmem:[%s2 + $0x60] sm:$0xff]
    %v137 = vld [vmem:[%s2 + $0x68] sm:$0xff]
    %v138 = vld [vmem:[%s2 + $0x70] sm:$0xff]
    %v139 = vld [vmem:[%s2 + $0x78] sm:$0xff]
    %v140 = vld [vmem:[%s2 + $0x80] sm:$0xff]
    %v141 = vld [vmem:[%s2 + $0x88] sm:$0xff]
    %v142 = vld [vmem:[%s2 + $0x90] sm:$0xff]
    %v143 = vld [vmem:[%s2 + $0x98] sm:$0xff]
    %v144 = vld [vmem:[%s2 + $0xa0] sm:$0xff]
    %v145 = vld [vmem:[%s2 + $0xa8] sm:$0xff]
    %v146 = vld [vmem:[%s2 + $0xb0] sm:$0xff]
    %v147 = vld [vmem:[%s2 + $0xb8] sm:$0xff]
    %v148 = vld [vmem:[%s2 + $0xc0] sm:$0xff]
    %v149 = vld [vmem:[%s2 + $0xc8] sm:$0xff]
    %v150 = vld [vmem:[%s2 + $0xd0] sm:$0xff]
    %v151 = vld [vmem:[%s2 + $0xd8] sm:$0xff]
    %v152 = vld [vmem:[%s2 + $0xe0] sm:$0xff]
    %v153 = vld [vmem:[%s2 + $0xe8] sm:$0xff]
    %v154 = vld [vmem:[%s2 + $0xf0] sm:$0xff]
    %v155 = vld [vmem:[%s2 + $0xf8] sm:$0xff]
    %v157 = vlaneseq
    %v158 = vshrl.u32 %v157, 7
    %v159 = vsub.s32 0, %v158
    %v160 = vrot.slane %v123, %v159
    %v161 = vlaneseq
    %v162 = vshrl.u32 %v161, 7
    %v163 = vsub.s32 1, %v162
    %v164 = vrot.slane %v123, %v163
    %167 = vmatprep.subr.mxu0 0.0
    %168 = vmatpush1.msra.mxu0 %v124
    %169 = vmatprep.subr.mxu0 0.0
    %170 = vmatpush1.msra.mxu0 %v125
    %171 = vmatprep.subr.mxu0 0.0
    %172 = vmatpush1.msra.mxu0 %v126
    %173 = vmatprep.subr.mxu0 0.0
    %174 = vmatpush1.msra.mxu0 %v127
    %175 = vmatprep.subr.mxu0 0.0
    %176 = vmatpush1.msra.mxu0 %v128
    %177 = vmatprep.subr.mxu0 0.0
    %178 = vmatpush1.msra.mxu0 %v129
    %179 = vmatprep.subr.mxu0 0.0
    %180 = vmatpush1.msra.mxu0 %v130
    %181 = vmatprep.subr.mxu0 0.0
    %182 = vmatpush1.msra.mxu0 %v131
    %183 = vmatprep.subr.mxu0 0.0
    %184 = vmatpush1.msra.mxu0 %v132
    %185 = vmatprep.subr.mxu0 0.0
    %186 = vmatpush1.msra.mxu0 %v133
    %187 = vmatprep.subr.mxu0 0.0
    %188 = vmatpush1.msra.mxu0 %v134
    %189 = vmatprep.subr.mxu0 0.0
    %190 = vmatpush1.msra.mxu0 %v135
    %191 = vmatprep.subr.mxu0 0.0
    %192 = vmatpush1.msra.mxu0 %v136
    %193 = vmatprep.subr.mxu0 0.0
    %194 = vmatpush1.msra.mxu0 %v137
    %195 = vmatprep.subr.mxu0 0.0
    %196 = vmatpush1.msra.mxu0 %v138
    %197 = vmatprep.subr.mxu0 0.0
    %198 = vmatpush1.msra.mxu0 %v139
    %199 = vmatprep.subr.mxu0 0.0
    %200 = vmatpush1.msra.mxu0 %v140
    %201 = vmatprep.subr.mxu0 0.0
    %202 = vmatpush1.msra.mxu0 %v141
    %203 = vmatprep.subr.mxu0 0.0
    %204 = vmatpush1.msra.mxu0 %v142
    %205 = vmatprep.subr.mxu0 0.0
    %206 = vmatpush1.msra.mxu0 %v143
    %207 = vmatprep.subr.mxu0 0.0
    %208 = vmatpush1.msra.mxu0 %v144
    %209 = vmatprep.subr.mxu0 0.0
    %210 = vmatpush1.msra.mxu0 %v145
    %211 = vmatprep.subr.mxu0 0.0
    %212 = vmatpush1.msra.mxu0 %v146
    %213 = vmatprep.subr.mxu0 0.0
    %214 = vmatpush1.msra.mxu0 %v147
    %215 = vmatprep.subr.mxu0 0.0
    %216 = vmatpush1.msra.mxu0 %v148
    %217 = vmatprep.subr.mxu0 0.0
    %218 = vmatpush1.msra.mxu0 %v149
    %219 = vmatprep.subr.mxu0 0.0
    %220 = vmatpush1.msra.mxu0 %v150
    %221 = vmatprep.subr.mxu0 0.0
    %222 = vmatpush1.msra.mxu0 %v151
    %223 = vmatprep.subr.mxu0 0.0
    %224 = vmatpush1.msra.mxu0 %v152
    %225 = vmatprep.subr.mxu0 0.0
    %226 = vmatpush1.msra.mxu0 %v153
    %227 = vmatprep.subr.mxu0 0.0
    %228 = vmatpush1.msra.mxu0 %v154
    %229 = vmatprep.subr.mxu0 0.0
    %230 = vmatpush1.msra.mxu0 %v155
    %231 = vmatprep.mubr.f32.mxu0 %v164
    %232 = vmatmul.mubr.f32.gmra.mrb[0].mxu0 %v160
    %v233 = vpop.f32.mrb[0].mxu0
    %v234 = vadd.f32 0.0, %v233
    %v235 = vpop.f32.mrb[0].mxu0
    %236 = vdwg.mxu0
    %s237 = scalar_lea.vmem %s3, %s104
    %v238 = vld [vmem:[%s237] sm:$0x1]
    %s239 = scalar_lea.vmem %s4, %s104
    %v240 = vld [vmem:[%s239] sm:$0x1]
    %v241 = vld [vmem:[%s10] sm:$0x1]
    %v242 = vmul.f32 %v234, %v234
    %vm243 = vcmask 253952
    %v244 = vsel %vm243, %v242, 0.0
    %245 = vadd.xlane.f32.xlu0 %v244
    %v246 = vpop.xlane.xlu0 %245
    %v247 = vrcp.pop 32.0
    %v248 = vmul.f32 %v246, %v247
    %v249 = vadd.f32 %v248, 1e-05
    %v250 = vrsqrt.pop %v249
    %v251 = vmul.f32 %v234, %v250
    %v252 = vmul.f32 %v251, %v241
    %v253 = vld [vmem:[%s11] sm:$0xff]
    %v254 = vld [vmem:[%s11 + $0x8] sm:$0xff]
    %v255 = vld [vmem:[%s11 + $0x10] sm:$0xff]
    %v256 = vld [vmem:[%s11 + $0x18] sm:$0xff]
    %v258 = vsel %vm86, %v252, 0
    %260 = vmatprep.subr.mxu0 0.0
    %261 = vmatpush1.msra.mxu0 %v253
    %262 = vmatprep.subr.mxu0 0.0
    %263 = vmatpush1.msra.mxu0 %v254
    %264 = vmatprep.subr.mxu0 0.0
    %265 = vmatpush1.msra.mxu0 %v255
    %266 = vmatprep.subr.mxu0 0.0
    %267 = vmatpush1.msra.mxu0 %v256
    %268 = vmatprep.subr.mxu0 0.0
    %269 = vmatpush1.msra.mxu0 0.0
    %270 = vmatprep.subr.mxu0 0.0
    %271 = vmatpush1.msra.mxu0 0.0
    %272 = vmatprep.subr.mxu0 0.0
    %273 = vmatpush1.msra.mxu0 0.0
    %274 = vmatprep.subr.mxu0 0.0
    %275 = vmatpush1.msra.mxu0 0.0
    %276 = vmatprep.subr.mxu0 0.0
    %277 = vmatpush1.msra.mxu0 0.0
    %278 = vmatprep.subr.mxu0 0.0
    %279 = vmatpush1.msra.mxu0 0.0
    %280 = vmatprep.subr.mxu0 0.0
    %281 = vmatpush1.msra.mxu0 0.0
    %282 = vmatprep.subr.mxu0 0.0
    %283 = vmatpush1.msra.mxu0 0.0
    %284 = vmatprep.subr.mxu0 0.0
    %285 = vmatpush1.msra.mxu0 0.0
    %286 = vmatprep.subr.mxu0 0.0
    %287 = vmatpush1.msra.mxu0 0.0
    %288 = vmatprep.subr.mxu0 0.0
    %289 = vmatpush1.msra.mxu0 0.0
    %290 = vmatprep.subr.mxu0 0.0
    %291 = vmatpush1.msra.mxu0 0.0
    %292 = vmatprep.subr.mxu0 0.0
    %293 = vmatpush1.msra.mxu0 0.0
    %294 = vmatprep.subr.mxu0 0.0
    %295 = vmatpush1.msra.mxu0 0.0
    %296 = vmatprep.subr.mxu0 0.0
    %297 = vmatpush1.msra.mxu0 0.0
    %298 = vmatprep.subr.mxu0 0.0
    %299 = vmatpush1.msra.mxu0 0.0
    %300 = vmatprep.subr.mxu0 0.0
    %301 = vmatpush1.msra.mxu0 0.0
    %302 = vmatprep.subr.mxu0 0.0
    %303 = vmatpush1.msra.mxu0 0.0
    %304 = vmatprep.subr.mxu0 0.0
    %305 = vmatpush1.msra.mxu0 0.0
    %306 = vmatprep.subr.mxu0 0.0
    %307 = vmatpush1.msra.mxu0 0.0
    %308 = vmatprep.subr.mxu0 0.0
    %309 = vmatpush1.msra.mxu0 0.0
    %310 = vmatprep.subr.mxu0 0.0
    %311 = vmatpush1.msra.mxu0 0.0
    %312 = vmatprep.subr.mxu0 0.0
    %313 = vmatpush1.msra.mxu0 0.0
    %314 = vmatprep.subr.mxu0 0.0
    %315 = vmatpush1.msra.mxu0 0.0
    %316 = vmatprep.subr.mxu0 0.0
    %317 = vmatpush1.msra.mxu0 0.0
    %318 = vmatprep.subr.mxu0 0.0
    %319 = vmatpush1.msra.mxu0 0.0
    %320 = vmatprep.subr.mxu0 0.0
    %321 = vmatpush1.msra.mxu0 0.0
    %322 = vmatprep.subr.mxu0 0.0
    %323 = vmatpush1.msra.mxu0 0.0
    %324 = vmatprep.mubr.f32.mxu0 0.0
    %325 = vmatmul.mubr.f32.gmra.mrb[0].mxu0 %v258
    %v326 = vpop.f32.mrb[0].mxu0
    %v327 = vadd.f32 0.0, %v326
    %v328 = vpop.f32.mrb[0].mxu0
    %329 = vdwg.mxu0
    %v330 = vmul.f32 %v327, %v238
    %332 = vrot.lane.b32.xlu0 %v240, 16
    %v333 = vpop.permute.xlu0 %332
    %v335 = vmul.f32 %v327, %v333
    %337 = vrot.lane.b32.xlu0 %v335, 112
    %v338 = vpop.permute.xlu0 %337
    %v340 = vsub.f32 %v330, %v338
    %342 = vrot.lane.b32.xlu0 %v238, 16
    %v343 = vpop.permute.xlu0 %342
    %v345 = vmul.f32 %v327, %v343
    %v346 = vmul.f32 %v327, %v240
    %348 = vrot.lane.b32.xlu0 %v346, 16
    %v349 = vpop.permute.xlu0 %348
    %v351 = vadd.f32 %v345, %v349
    %352 = vrot.lane.b32.xlu0 %v238, 32
    %v353 = vpop.permute.xlu0 %352
    %v355 = vmul.f32 %v327, %v353
    %356 = vrot.lane.b32.xlu0 %v240, 48
    %v357 = vpop.permute.xlu0 %356
    %v359 = vmul.f32 %v327, %v357
    %361 = vrot.lane.b32.xlu0 %v359, 112
    %v362 = vpop.permute.xlu0 %361
    %v364 = vsub.f32 %v355, %v362
    %365 = vrot.lane.b32.xlu0 %v238, 48
    %v366 = vpop.permute.xlu0 %365
    %v368 = vmul.f32 %v327, %v366
    %369 = vrot.lane.b32.xlu0 %v240, 32
    %v370 = vpop.permute.xlu0 %369
    %v372 = vmul.f32 %v327, %v370
    %374 = vrot.lane.b32.xlu0 %v372, 16
    %v375 = vpop.permute.xlu0 %374
    %v377 = vadd.f32 %v368, %v375
    %379 = vrot.lane.b32.xlu0 %v364, 96
    %v380 = vpop.permute.xlu0 %379
    %s382 = scalar_lea.vmem [#allocation3], %s104
    %vm383 = vcmask 122880
    %384 = vst.msk [vmem:[%s382] sm:$0x1] %vm383, %v380
    %386 = vrot.lane.b32.xlu0 %v377, 80
    %v387 = vpop.permute.xlu0 %386
    %s389 = scalar_lea.vmem [#allocation4], %s104
    %390 = vst.msk [vmem:[%s389] sm:$0x1] %vm383, %v387
    %392 = vrot.lane.b32.xlu0 %v327, 64
    %v393 = vpop.permute.xlu0 %392
    %s395 = scalar_lea.vmem [#allocation5], %s104
    %396 = vst.msk [vmem:[%s395] sm:$0x1] %vm243, %v393
    %v397 = vld [vmem:[#allocation3] sm:$0xff]
    %v398 = vld [vmem:[#allocation3 + $0x8] sm:$0xff]
    %v399 = vlaneseq
    %v400 = vshrl.u32 %v399, 7
    %v401 = vsub.s32 0, %v400
    %v402 = vrot.slane %v340, %v401
    %v403 = vmul.f32 %v397, %v402
    %v404 = vmul.f32 %v398, %v402
    %v405 = vld [vmem:[#allocation4] sm:$0xff]
    %v406 = vld [vmem:[#allocation4 + $0x8] sm:$0xff]
    %v407 = vlaneseq
    %v408 = vshrl.u32 %v407, 7
    %v409 = vsub.s32 0, %v408
    %v410 = vrot.slane %v351, %v409
    %412 = vrot.lane.b32.xlu0 %v410, 112
    %v413 = vpop.permute.xlu0 %412
    %v415 = vmul.f32 %v405, %v413
    %v416 = vmul.f32 %v406, %v413
    %v417 = vadd.f32 %v403, %v415
    %v418 = vadd.f32 %v404, %v416
    %v419 = vld [vmem:[%s5] sm:$0xff]
    %v420 = vld [vmem:[%s5 + $0x8] sm:$0xff]
    %v422 = vsel %vm81, %v417, 0
    %v425 = vsel %vm81, %v418, 0
    %427 = vmatprep.subr.mxu0 0.0
    %428 = vmatpush1.msra.mxu0 %v419
    %429 = vmatprep.subr.mxu0 0.0
    %430 = vmatpush1.msra.mxu0 %v420
    %431 = vmatprep.subr.mxu0 0.0
    %432 = vmatpush1.msra.mxu0 0.0
    %433 = vmatprep.subr.mxu0 0.0
    %434 = vmatpush1.msra.mxu0 0.0
    %435 = vmatprep.subr.mxu0 0.0
    %436 = vmatpush1.msra.mxu0 0.0
    %437 = vmatprep.subr.mxu0 0.0
    %438 = vmatpush1.msra.mxu0 0.0
    %439 = vmatprep.subr.mxu0 0.0
    %440 = vmatpush1.msra.mxu0 0.0
    %441 = vmatprep.subr.mxu0 0.0
    %442 = vmatpush1.msra.mxu0 0.0
    %443 = vmatprep.subr.mxu0 0.0
    %444 = vmatpush1.msra.mxu0 0.0
    %445 = vmatprep.subr.mxu0 0.0
    %446 = vmatpush1.msra.mxu0 0.0
    %447 = vmatprep.subr.mxu0 0.0
    %448 = vmatpush1.msra.mxu0 0.0
    %449 = vmatprep.subr.mxu0 0.0
    %450 = vmatpush1.msra.mxu0 0.0
    %451 = vmatprep.subr.mxu0 0.0
    %452 = vmatpush1.msra.mxu0 0.0
    %453 = vmatprep.subr.mxu0 0.0
    %454 = vmatpush1.msra.mxu0 0.0
    %455 = vmatprep.subr.mxu0 0.0
    %456 = vmatpush1.msra.mxu0 0.0
    %457 = vmatprep.subr.mxu0 0.0
    %458 = vmatpush1.msra.mxu0 0.0
    %459 = vmatprep.subr.mxu0 0.0
    %460 = vmatpush1.msra.mxu0 0.0
    %461 = vmatprep.subr.mxu0 0.0
    %462 = vmatpush1.msra.mxu0 0.0
    %463 = vmatprep.subr.mxu0 0.0
    %464 = vmatpush1.msra.mxu0 0.0
    %465 = vmatprep.subr.mxu0 0.0
    %466 = vmatpush1.msra.mxu0 0.0
    %467 = vmatprep.subr.mxu0 0.0
    %468 = vmatpush1.msra.mxu0 0.0
    %469 = vmatprep.subr.mxu0 0.0
    %470 = vmatpush1.msra.mxu0 0.0
    %471 = vmatprep.subr.mxu0 0.0
    %472 = vmatpush1.msra.mxu0 0.0
    %473 = vmatprep.subr.mxu0 0.0
    %474 = vmatpush1.msra.mxu0 0.0
    %475 = vmatprep.subr.mxu0 0.0
    %476 = vmatpush1.msra.mxu0 0.0
    %477 = vmatprep.subr.mxu0 0.0
    %478 = vmatpush1.msra.mxu0 0.0
    %479 = vmatprep.subr.mxu0 0.0
    %480 = vmatpush1.msra.mxu0 0.0
    %481 = vmatprep.subr.mxu0 0.0
    %482 = vmatpush1.msra.mxu0 0.0
    %483 = vmatprep.subr.mxu0 0.0
    %484 = vmatpush1.msra.mxu0 0.0
    %485 = vmatprep.subr.mxu0 0.0
    %486 = vmatpush1.msra.mxu0 0.0
    %487 = vmatprep.subr.mxu0 0.0
    %488 = vmatpush1.msra.mxu0 0.0
    %489 = vmatprep.subr.mxu0 0.0
    %490 = vmatpush1.msra.mxu0 0.0
    %491 = vmatprep.mubr.f32.mxu0 0.0
    %492 = vmatmul.mubr.f32.gmra.mrb[0].mxu0 %v422
    %v493 = vpop.f32.mrb[0].mxu0
    %v494 = vadd.f32 0.0, %v493
    %v495 = vpop.f32.mrb[0].mxu0
    %496 = vmatprep.mubr.f32.mxu0 0.0
    %497 = vmatmul.mubr.f32.gmra.mrb[0].mxu0 %v425
    %v498 = vpop.f32.mrb[0].mxu0
    %v499 = vadd.f32 0.0, %v498
    %v500 = vpop.f32.mrb[0].mxu0
    %501 = vdwg.mxu0
    %v502 = vmul.f32 %v494, 0.35355338
    %v503 = vmul.f32 %v499, 0.35355338
    %v504 = vstv %s104
    %vm505 = vcmp.le.s32.totalorder %v96, %v504
    %vm506 = vcmp.le.s32.totalorder %v97, %v504
    %v507 = vsel %vm505, %v502, -1e+30
    %v508 = vsel %vm506, %v503, -1e+30
    %vm509 = vcmask 31744
    %v510 = vsel %vm509, %v507, -inf
    %v511 = vsel %vm509, %v508, -inf
    %v512 = vmax.f32 %v510, %v511
    %v513 = vrot.slane %v512, 4
    %v514 = vmax.f32 %v512, %v513
    %v515 = vrot.slane %v514, 2
    %v516 = vmax.f32 %v514, %v515
    %v517 = vrot.slane %v516, 1
    %v518 = vmax.f32 %v516, %v517
    %v519 = vsub.f32 %v507, %v518
    %v520 = vsub.f32 %v508, %v518
    %v521 = vmul.f32 %v519, 1.442695
    %v522 = vpow.pop %v521
    %v523 = vmul.f32 %v520, 1.442695
    %v524 = vpow.pop %v523
    %v525 = vsel %vm509, %v522, 0.0
    %v526 = vsel %vm509, %v524, 0.0
    %v527 = vadd.f32 %v525, %v526
    %v528 = vrot.slane %v527, 4
    %v529 = vadd.f32 %v527, %v528
    %v530 = vrot.slane %v529, 2
    %v531 = vadd.f32 %v529, %v530
    %v532 = vrot.slane %v531, 1
    %v533 = vadd.f32 %v531, %v532
    %v534 = vrcp.pop %v533
    %v535 = vmul.f32 %v522, %v534
    %v536 = vmul.f32 %v524, %v534
    %v537 = vld [vmem:[%s6] sm:$0xf]
    %v539 = vsel %vm509, %v535, 0
    %v542 = vsel %vm509, %v536, 0
    %vm544 = vcmask 1043456
    %v546 = vsel %vm544, %v537, 0
    %548 = vmatprep.subr.mxu0 0.0
    %549 = vmatpush1.msra.mxu0 %v546
    %550 = vmatprep.subr.mxu0 0.0
    %551 = vmatpush1.msra.mxu0 0.0
    %552 = vmatprep.subr.mxu0 0.0
    %553 = vmatpush1.msra.mxu0 0.0
    %554 = vmatprep.subr.mxu0 0.0
    %555 = vmatpush1.msra.mxu0 0.0
    %556 = vmatprep.subr.mxu0 0.0
    %557 = vmatpush1.msra.mxu0 0.0
    %558 = vmatprep.subr.mxu0 0.0
    %559 = vmatpush1.msra.mxu0 0.0
    %560 = vmatprep.subr.mxu0 0.0
    %561 = vmatpush1.msra.mxu0 0.0
    %562 = vmatprep.subr.mxu0 0.0
    %563 = vmatpush1.msra.mxu0 0.0
    %564 = vmatprep.subr.mxu0 0.0
    %565 = vmatpush1.msra.mxu0 0.0
    %566 = vmatprep.subr.mxu0 0.0
    %567 = vmatpush1.msra.mxu0 0.0
    %568 = vmatprep.subr.mxu0 0.0
    %569 = vmatpush1.msra.mxu0 0.0
    %570 = vmatprep.subr.mxu0 0.0
    %571 = vmatpush1.msra.mxu0 0.0
    %572 = vmatprep.subr.mxu0 0.0
    %573 = vmatpush1.msra.mxu0 0.0
    %574 = vmatprep.subr.mxu0 0.0
    %575 = vmatpush1.msra.mxu0 0.0
    %576 = vmatprep.subr.mxu0 0.0
    %577 = vmatpush1.msra.mxu0 0.0
    %578 = vmatprep.subr.mxu0 0.0
    %579 = vmatpush1.msra.mxu0 0.0
    %580 = vmatprep.subr.mxu0 0.0
    %581 = vmatpush1.msra.mxu0 0.0
    %582 = vmatprep.subr.mxu0 0.0
    %583 = vmatpush1.msra.mxu0 0.0
    %584 = vmatprep.subr.mxu0 0.0
    %585 = vmatpush1.msra.mxu0 0.0
    %586 = vmatprep.subr.mxu0 0.0
    %587 = vmatpush1.msra.mxu0 0.0
    %588 = vmatprep.subr.mxu0 0.0
    %589 = vmatpush1.msra.mxu0 0.0
    %590 = vmatprep.subr.mxu0 0.0
    %591 = vmatpush1.msra.mxu0 0.0
    %592 = vmatprep.subr.mxu0 0.0
    %593 = vmatpush1.msra.mxu0 0.0
    %594 = vmatprep.subr.mxu0 0.0
    %595 = vmatpush1.msra.mxu0 0.0
    %596 = vmatprep.subr.mxu0 0.0
    %597 = vmatpush1.msra.mxu0 0.0
    %598 = vmatprep.subr.mxu0 0.0
    %599 = vmatpush1.msra.mxu0 0.0
    %600 = vmatprep.subr.mxu0 0.0
    %601 = vmatpush1.msra.mxu0 0.0
    %602 = vmatprep.subr.mxu0 0.0
    %603 = vmatpush1.msra.mxu0 0.0
    %604 = vmatprep.subr.mxu0 0.0
    %605 = vmatpush1.msra.mxu0 0.0
    %606 = vmatprep.subr.mxu0 0.0
    %607 = vmatpush1.msra.mxu0 0.0
    %608 = vmatprep.subr.mxu0 0.0
    %609 = vmatpush1.msra.mxu0 0.0
    %610 = vmatprep.subr.mxu0 0.0
    %611 = vmatpush1.msra.mxu0 0.0
    %612 = vmatprep.mubr.f32.mxu0 0.0
    %613 = vmatmul.mubr.f32.gmra.mrb[0].mxu0 %v539
    %v614 = vpop.f32.mrb[0].mxu0
    %v615 = vadd.f32 0.0, %v614
    %v616 = vpop.f32.mrb[0].mxu0
    %617 = vmatprep.mubr.f32.mxu0 0.0
    %618 = vmatmul.mubr.f32.gmra.mrb[0].mxu0 %v542
    %v619 = vpop.f32.mrb[0].mxu0
    %v620 = vadd.f32 0.0, %v619
    %v621 = vpop.f32.mrb[0].mxu0
    %622 = vdwg.mxu0
    %v623 = vld [vmem:[#allocation5] sm:$0xff]
    %v624 = vld [vmem:[#allocation5 + $0x8] sm:$0xff]
    %v625 = vmul.f32 %v615, %v623
    %v626 = vmul.f32 %v620, %v624
    %v627 = vsel %vm86, %v625, 0.0
    %v628 = vsel %vm86, %v626, 0.0
    %v629 = vadd.f32 %v627, %v628
    %v630 = vrot.slane %v629, 4
    %v631 = vadd.f32 %v629, %v630
    %v632 = vrot.slane %v631, 2
    %v633 = vadd.f32 %v631, %v632
    %v634 = vrot.slane %v633, 1
    %v635 = vadd.f32 %v633, %v634
    %v636 = vld [vmem:[%s12] sm:$0xff]
    %v637 = vld [vmem:[%s12 + $0x8] sm:$0xff]
    %v638 = vld [vmem:[%s12 + $0x10] sm:$0xff]
    %v639 = vld [vmem:[%s12 + $0x18] sm:$0xff]
    %v641 = vsel %vm86, %v635, 0
    %643 = vmatprep.subr.mxu0 0.0
    %644 = vmatpush1.msra.mxu0 %v636
    %645 = vmatprep.subr.mxu0 0.0
    %646 = vmatpush1.msra.mxu0 %v637
    %647 = vmatprep.subr.mxu0 0.0
    %648 = vmatpush1.msra.mxu0 %v638
    %649 = vmatprep.subr.mxu0 0.0
    %650 = vmatpush1.msra.mxu0 %v639
    %651 = vmatprep.subr.mxu0 0.0
    %652 = vmatpush1.msra.mxu0 0.0
    %653 = vmatprep.subr.mxu0 0.0
    %654 = vmatpush1.msra.mxu0 0.0
    %655 = vmatprep.subr.mxu0 0.0
    %656 = vmatpush1.msra.mxu0 0.0
    %657 = vmatprep.subr.mxu0 0.0
    %658 = vmatpush1.msra.mxu0 0.0
    %659 = vmatprep.subr.mxu0 0.0
    %660 = vmatpush1.msra.mxu0 0.0
    %661 = vmatprep.subr.mxu0 0.0
    %662 = vmatpush1.msra.mxu0 0.0
    %663 = vmatprep.subr.mxu0 0.0
    %664 = vmatpush1.msra.mxu0 0.0
    %665 = vmatprep.subr.mxu0 0.0
    %666 = vmatpush1.msra.mxu0 0.0
    %667 = vmatprep.subr.mxu0 0.0
    %668 = vmatpush1.msra.mxu0 0.0
    %669 = vmatprep.subr.mxu0 0.0
    %670 = vmatpush1.msra.mxu0 0.0
    %671 = vmatprep.subr.mxu0 0.0
    %672 = vmatpush1.msra.mxu0 0.0
    %673 = vmatprep.subr.mxu0 0.0
    %674 = vmatpush1.msra.mxu0 0.0
    %675 = vmatprep.subr.mxu0 0.0
    %676 = vmatpush1.msra.mxu0 0.0
    %677 = vmatprep.subr.mxu0 0.0
    %678 = vmatpush1.msra.mxu0 0.0
    %679 = vmatprep.subr.mxu0 0.0
    %680 = vmatpush1.msra.mxu0 0.0
    %681 = vmatprep.subr.mxu0 0.0
    %682 = vmatpush1.msra.mxu0 0.0
    %683 = vmatprep.subr.mxu0 0.0
    %684 = vmatpush1.msra.mxu0 0.0
    %685 = vmatprep.subr.mxu0 0.0
    %686 = vmatpush1.msra.mxu0 0.0
    %687 = vmatprep.subr.mxu0 0.0
    %688 = vmatpush1.msra.mxu0 0.0
    %689 = vmatprep.subr.mxu0 0.0
    %690 = vmatpush1.msra.mxu0 0.0
    %691 = vmatprep.subr.mxu0 0.0
    %692 = vmatpush1.msra.mxu0 0.0
    %693 = vmatprep.subr.mxu0 0.0
    %694 = vmatpush1.msra.mxu0 0.0
    %695 = vmatprep.subr.mxu0 0.0
    %696 = vmatpush1.msra.mxu0 0.0
    %697 = vmatprep.subr.mxu0 0.0
    %698 = vmatpush1.msra.mxu0 0.0
    %699 = vmatprep.subr.mxu0 0.0
    %700 = vmatpush1.msra.mxu0 0.0
    %701 = vmatprep.subr.mxu0 0.0
    %702 = vmatpush1.msra.mxu0 0.0
    %703 = vmatprep.subr.mxu0 0.0
    %704 = vmatpush1.msra.mxu0 0.0
    %705 = vmatprep.subr.mxu0 0.0
    %706 = vmatpush1.msra.mxu0 0.0
    %707 = vmatprep.mubr.f32.mxu0 0.0
    %708 = vmatmul.mubr.f32.gmra.mrb[0].mxu0 %v641
    %v709 = vpop.f32.mrb[0].mxu0
    %v710 = vadd.f32 0.0, %v709
    %v711 = vpop.f32.mrb[0].mxu0
    %712 = vdwg.mxu0
    %v713 = vadd.f32 %v234, %v710
    %v714 = vld [vmem:[%s13] sm:$0x1]
    %v715 = vmul.f32 %v713, %v713
    %v716 = vsel %vm243, %v715, 0.0
    %717 = vadd.xlane.f32.xlu0 %v716
    %v718 = vpop.xlane.xlu0 %717
    %v719 = vmul.f32 %v718, %v247
    %v720 = vadd.f32 %v719, 1e-05
    %v721 = vrsqrt.pop %v720
    %v722 = vmul.f32 %v713, %v721
    %v723 = vmul.f32 %v722, %v714
    %v724 = vld [vmem:[%s14] sm:$0xff]
    %v725 = vld [vmem:[%s14 + $0x8] sm:$0xff]
    %v726 = vld [vmem:[%s14 + $0x10] sm:$0xff]
    %v727 = vld [vmem:[%s14 + $0x18] sm:$0xff]
    %v729 = vsel %vm86, %v723, 0
    %731 = vmatprep.subr.mxu0 0.0
    %732 = vmatpush1.msra.mxu0 %v724
    %733 = vmatprep.subr.mxu0 0.0
    %734 = vmatpush1.msra.mxu0 %v725
    %735 = vmatprep.subr.mxu0 0.0
    %736 = vmatpush1.msra.mxu0 %v726
    %737 = vmatprep.subr.mxu0 0.0
    %738 = vmatpush1.msra.mxu0 %v727
    %739 = vmatprep.subr.mxu0 0.0
    %740 = vmatpush1.msra.mxu0 0.0
    %741 = vmatprep.subr.mxu0 0.0
    %742 = vmatpush1.msra.mxu0 0.0
    %743 = vmatprep.subr.mxu0 0.0
    %744 = vmatpush1.msra.mxu0 0.0
    %745 = vmatprep.subr.mxu0 0.0
    %746 = vmatpush1.msra.mxu0 0.0
    %747 = vmatprep.subr.mxu0 0.0
    %748 = vmatpush1.msra.mxu0 0.0
    %749 = vmatprep.subr.mxu0 0.0
    %750 = vmatpush1.msra.mxu0 0.0
    %751 = vmatprep.subr.mxu0 0.0
    %752 = vmatpush1.msra.mxu0 0.0
    %753 = vmatprep.subr.mxu0 0.0
    %754 = vmatpush1.msra.mxu0 0.0
    %755 = vmatprep.subr.mxu0 0.0
    %756 = vmatpush1.msra.mxu0 0.0
    %757 = vmatprep.subr.mxu0 0.0
    %758 = vmatpush1.msra.mxu0 0.0
    %759 = vmatprep.subr.mxu0 0.0
    %760 = vmatpush1.msra.mxu0 0.0
    %761 = vmatprep.subr.mxu0 0.0
    %762 = vmatpush1.msra.mxu0 0.0
    %763 = vmatprep.subr.mxu0 0.0
    %764 = vmatpush1.msra.mxu0 0.0
    %765 = vmatprep.subr.mxu0 0.0
    %766 = vmatpush1.msra.mxu0 0.0
    %767 = vmatprep.subr.mxu0 0.0
    %768 = vmatpush1.msra.mxu0 0.0
    %769 = vmatprep.subr.mxu0 0.0
    %770 = vmatpush1.msra.mxu0 0.0
    %771 = vmatprep.subr.mxu0 0.0
    %772 = vmatpush1.msra.mxu0 0.0
    %773 = vmatprep.subr.mxu0 0.0
    %774 = vmatpush1.msra.mxu0 0.0
    %775 = vmatprep.subr.mxu0 0.0
    %776 = vmatpush1.msra.mxu0 0.0
    %777 = vmatprep.subr.mxu0 0.0
    %778 = vmatpush1.msra.mxu0 0.0
    %779 = vmatprep.subr.mxu0 0.0
    %780 = vmatpush1.msra.mxu0 0.0
    %781 = vmatprep.subr.mxu0 0.0
    %782 = vmatpush1.msra.mxu0 0.0
    %783 = vmatprep.subr.mxu0 0.0
    %784 = vmatpush1.msra.mxu0 0.0
    %785 = vmatprep.subr.mxu0 0.0
    %786 = vmatpush1.msra.mxu0 0.0
    %787 = vmatprep.subr.mxu0 0.0
    %788 = vmatpush1.msra.mxu0 0.0
    %789 = vmatprep.subr.mxu0 0.0
    %790 = vmatpush1.msra.mxu0 0.0
    %791 = vmatprep.subr.mxu0 0.0
    %792 = vmatpush1.msra.mxu0 0.0
    %793 = vmatprep.subr.mxu0 0.0
    %794 = vmatpush1.msra.mxu0 0.0
    %795 = vmatprep.mubr.f32.mxu0 0.0
    %796 = vmatmul.mubr.f32.gmra.mrb[0].mxu0 %v729
    %v797 = vpop.f32.mrb[0].mxu0
    %v798 = vadd.f32 0.0, %v797
    %v799 = vpop.f32.mrb[0].mxu0
    %800 = vdwg.mxu0
    %v801 = vxor.u32 %v798, 2147483648
    %v802 = vmul.f32 %v801, 1.442695
    %v803 = vpow.pop %v802
    %v804 = vadd.f32 %v803, 1.0
    %v805 = vrcp.pop %v804
    %v806 = vmul.f32 1.0, %v805
    %v807 = vmul.f32 %v798, %v806
    %809 = vrot.lane.b32.xlu0 %v798, 64
    %v810 = vpop.permute.xlu0 %809
    %v812 = vmul.f32 %v807, %v810
    %v813 = vld [vmem:[%s15] sm:$0xff]
    %v814 = vld [vmem:[%s15 + $0x8] sm:$0xff]
    %v815 = vld [vmem:[%s15 + $0x10] sm:$0xff]
    %v816 = vld [vmem:[%s15 + $0x18] sm:$0xff]
    %v817 = vld [vmem:[%s15 + $0x20] sm:$0xff]
    %v818 = vld [vmem:[%s15 + $0x28] sm:$0xff]
    %v819 = vld [vmem:[%s15 + $0x30] sm:$0xff]
    %v820 = vld [vmem:[%s15 + $0x38] sm:$0xff]
    %vm821 = vcmask 523264
    %v823 = vsel %vm821, %v812, 0
    %825 = vmatprep.subr.mxu0 0.0
    %826 = vmatpush1.msra.mxu0 %v813
    %827 = vmatprep.subr.mxu0 0.0
    %828 = vmatpush1.msra.mxu0 %v814
    %829 = vmatprep.subr.mxu0 0.0
    %830 = vmatpush1.msra.mxu0 %v815
    %831 = vmatprep.subr.mxu0 0.0
    %832 = vmatpush1.msra.mxu0 %v816
    %833 = vmatprep.subr.mxu0 0.0
    %834 = vmatpush1.msra.mxu0 %v817
    %835 = vmatprep.subr.mxu0 0.0
    %836 = vmatpush1.msra.mxu0 %v818
    %837 = vmatprep.subr.mxu0 0.0
    %838 = vmatpush1.msra.mxu0 %v819
    %839 = vmatprep.subr.mxu0 0.0
    %840 = vmatpush1.msra.mxu0 %v820
    %841 = vmatprep.subr.mxu0 0.0
    %842 = vmatpush1.msra.mxu0 0.0
    %843 = vmatprep.subr.mxu0 0.0
    %844 = vmatpush1.msra.mxu0 0.0
    %845 = vmatprep.subr.mxu0 0.0
    %846 = vmatpush1.msra.mxu0 0.0
    %847 = vmatprep.subr.mxu0 0.0
    %848 = vmatpush1.msra.mxu0 0.0
    %849 = vmatprep.subr.mxu0 0.0
    %850 = vmatpush1.msra.mxu0 0.0
    %851 = vmatprep.subr.mxu0 0.0
    %852 = vmatpush1.msra.mxu0 0.0
    %853 = vmatprep.subr.mxu0 0.0
    %854 = vmatpush1.msra.mxu0 0.0
    %855 = vmatprep.subr.mxu0 0.0
    %856 = vmatpush1.msra.mxu0 0.0
    %857 = vmatprep.subr.mxu0 0.0
    %858 = vmatpush1.msra.mxu0 0.0
    %859 = vmatprep.subr.mxu0 0.0
    %860 = vmatpush1.msra.mxu0 0.0
    %861 = vmatprep.subr.mxu0 0.0
    %862 = vmatpush1.msra.mxu0 0.0
    %863 = vmatprep.subr.mxu0 0.0
    %864 = vmatpush1.msra.mxu0 0.0
    %865 = vmatprep.subr.mxu0 0.0
    %866 = vmatpush1.msra.mxu0 0.0
    %867 = vmatprep.subr.mxu0 0.0
    %868 = vmatpush1.msra.mxu0 0.0
    %869 = vmatprep.subr.mxu0 0.0
    %870 = vmatpush1.msra.mxu0 0.0
    %871 = vmatprep.subr.mxu0 0.0
    %872 = vmatpush1.msra.mxu0 0.0
    %873 = vmatprep.subr.mxu0 0.0
    %874 = vmatpush1.msra.mxu0 0.0
    %875 = vmatprep.subr.mxu0 0.0
    %876 = vmatpush1.msra.mxu0 0.0
    %877 = vmatprep.subr.mxu0 0.0
    %878 = vmatpush1.msra.mxu0 0.0
    %879 = vmatprep.subr.mxu0 0.0
    %880 = vmatpush1.msra.mxu0 0.0
    %881 = vmatprep.subr.mxu0 0.0
    %882 = vmatpush1.msra.mxu0 0.0
    %883 = vmatprep.subr.mxu0 0.0
    %884 = vmatpush1.msra.mxu0 0.0
    %885 = vmatprep.subr.mxu0 0.0
    %886 = vmatpush1.msra.mxu0 0.0
    %887 = vmatprep.subr.mxu0 0.0
    %888 = vmatpush1.msra.mxu0 0.0
    %889 = vmatprep.mubr.f32.mxu0 0.0
    %890 = vmatmul.mubr.f32.gmra.mrb[0].mxu0 %v823
    %v891 = vpop.f32.mrb[0].mxu0
    %v892 = vadd.f32 0.0, %v891
    %v893 = vpop.f32.mrb[0].mxu0
    %894 = vdwg.mxu0
    %v895 = vadd.f32 %v713, %v892
    %v896 = vld [vmem:[%s16] sm:$0x1]
    %v897 = vmul.f32 %v895, %v895
    %v898 = vsel %vm243, %v897, 0.0
    %899 = vadd.xlane.f32.xlu0 %v898
    %v900 = vpop.xlane.xlu0 %899
    %v901 = vmul.f32 %v900, %v247
    %v902 = vadd.f32 %v901, 1e-05
    %v903 = vrsqrt.pop %v902
    %v904 = vmul.f32 %v895, %v903
    %v905 = vmul.f32 %v904, %v896
    %v906 = vld [vmem:[%s17] sm:$0xff]
    %v907 = vld [vmem:[%s17 + $0x8] sm:$0xff]
    %v908 = vld [vmem:[%s17 + $0x10] sm:$0xff]
    %v909 = vld [vmem:[%s17 + $0x18] sm:$0xff]
    %v911 = vsel %vm86, %v905, 0
    %913 = vmatprep.subr.mxu0 0.0
    %914 = vmatpush1.msra.mxu0 %v906
    %915 = vmatprep.subr.mxu0 0.0
    %916 = vmatpush1.msra.mxu0 %v907
    %917 = vmatprep.subr.mxu0 0.0
    %918 = vmatpush1.msra.mxu0 %v908
    %919 = vmatprep.subr.mxu0 0.0
    %920 = vmatpush1.msra.mxu0 %v909
    %921 = vmatprep.subr.mxu0 0.0
    %922 = vmatpush1.msra.mxu0 0.0
    %923 = vmatprep.subr.mxu0 0.0
    %924 = vmatpush1.msra.mxu0 0.0
    %925 = vmatprep.subr.mxu0 0.0
    %926 = vmatpush1.msra.mxu0 0.0
    %927 = vmatprep.subr.mxu0 0.0
    %928 = vmatpush1.msra.mxu0 0.0
    %929 = vmatprep.subr.mxu0 0.0
    %930 = vmatpush1.msra.mxu0 0.0
    %931 = vmatprep.subr.mxu0 0.0
    %932 = vmatpush1.msra.mxu0 0.0
    %933 = vmatprep.subr.mxu0 0.0
    %934 = vmatpush1.msra.mxu0 0.0
    %935 = vmatprep.subr.mxu0 0.0
    %936 = vmatpush1.msra.mxu0 0.0
    %937 = vmatprep.subr.mxu0 0.0
    %938 = vmatpush1.msra.mxu0 0.0
    %939 = vmatprep.subr.mxu0 0.0
    %940 = vmatpush1.msra.mxu0 0.0
    %941 = vmatprep.subr.mxu0 0.0
    %942 = vmatpush1.msra.mxu0 0.0
    %943 = vmatprep.subr.mxu0 0.0
    %944 = vmatpush1.msra.mxu0 0.0
    %945 = vmatprep.subr.mxu0 0.0
    %946 = vmatpush1.msra.mxu0 0.0
    %947 = vmatprep.subr.mxu0 0.0
    %948 = vmatpush1.msra.mxu0 0.0
    %949 = vmatprep.subr.mxu0 0.0
    %950 = vmatpush1.msra.mxu0 0.0
    %951 = vmatprep.subr.mxu0 0.0
    %952 = vmatpush1.msra.mxu0 0.0
    %953 = vmatprep.subr.mxu0 0.0
    %954 = vmatpush1.msra.mxu0 0.0
    %955 = vmatprep.subr.mxu0 0.0
    %956 = vmatpush1.msra.mxu0 0.0
    %957 = vmatprep.subr.mxu0 0.0
    %958 = vmatpush1.msra.mxu0 0.0
    %959 = vmatprep.subr.mxu0 0.0
    %960 = vmatpush1.msra.mxu0 0.0
    %961 = vmatprep.subr.mxu0 0.0
    %962 = vmatpush1.msra.mxu0 0.0
    %963 = vmatprep.subr.mxu0 0.0
    %964 = vmatpush1.msra.mxu0 0.0
    %965 = vmatprep.subr.mxu0 0.0
    %966 = vmatpush1.msra.mxu0 0.0
    %967 = vmatprep.subr.mxu0 0.0
    %968 = vmatpush1.msra.mxu0 0.0
    %969 = vmatprep.subr.mxu0 0.0
    %970 = vmatpush1.msra.mxu0 0.0
    %971 = vmatprep.subr.mxu0 0.0
    %972 = vmatpush1.msra.mxu0 0.0
    %973 = vmatprep.subr.mxu0 0.0
    %974 = vmatpush1.msra.mxu0 0.0
    %975 = vmatprep.subr.mxu0 0.0
    %976 = vmatpush1.msra.mxu0 0.0
    %977 = vmatprep.mubr.f32.mxu0 0.0
    %978 = vmatmul.mubr.f32.gmra.mrb[0].mxu0 %v911
    %v979 = vpop.f32.mrb[0].mxu0
    %v980 = vadd.f32 0.0, %v979
    %v981 = vpop.f32.mrb[0].mxu0
    %982 = vdwg.mxu0
    %v983 = vmul.f32 %v980, %v238
    %v984 = vmul.f32 %v980, %v333
    %986 = vrot.lane.b32.xlu0 %v984, 112
    %v987 = vpop.permute.xlu0 %986
    %v989 = vsub.f32 %v983, %v987
    %v990 = vmul.f32 %v980, %v343
    %v991 = vmul.f32 %v980, %v240
    %993 = vrot.lane.b32.xlu0 %v991, 16
    %v994 = vpop.permute.xlu0 %993
    %v996 = vadd.f32 %v990, %v994
    %v997 = vmul.f32 %v980, %v353
    %v998 = vmul.f32 %v980, %v357
    %1000 = vrot.lane.b32.xlu0 %v998, 112
    %v1001 = vpop.permute.xlu0 %1000
    %v1003 = vsub.f32 %v997, %v1001
    %v1004 = vmul.f32 %v980, %v366
    %v1005 = vmul.f32 %v980, %v370
    %1007 = vrot.lane.b32.xlu0 %v1005, 16
    %v1008 = vpop.permute.xlu0 %1007
    %v1010 = vadd.f32 %v1004, %v1008
    %1012 = vrot.lane.b32.xlu0 %v1003, 96
    %v1013 = vpop.permute.xlu0 %1012
    %s1015 = scalar_lea.vmem [#allocation6], %s104
    %1016 = vst.msk [vmem:[%s1015] sm:$0x1] %vm383, %v1013
    %1018 = vrot.lane.b32.xlu0 %v1010, 80
    %v1019 = vpop.permute.xlu0 %1018
    %s1021 = scalar_lea.vmem [#allocation7], %s104
    %1022 = vst.msk [vmem:[%s1021] sm:$0x1] %vm383, %v1019
    %1024 = vrot.lane.b32.xlu0 %v980, 64
    %v1025 = vpop.permute.xlu0 %1024
    %s1027 = scalar_lea.vmem [#allocation8], %s104
    %1028 = vst.msk [vmem:[%s1027] sm:$0x1] %vm243, %v1025
    %v1029 = vld [vmem:[#allocation6] sm:$0xff]
    %v1030 = vld [vmem:[#allocation6 + $0x8] sm:$0xff]
    %v1031 = vlaneseq
    %v1032 = vshrl.u32 %v1031, 7
    %v1033 = vsub.s32 0, %v1032
    %v1034 = vrot.slane %v989, %v1033
    %v1035 = vmul.f32 %v1029, %v1034
    %v1036 = vmul.f32 %v1030, %v1034
    %v1037 = vld [vmem:[#allocation7] sm:$0xff]
    %v1038 = vld [vmem:[#allocation7 + $0x8] sm:$0xff]
    %v1039 = vlaneseq
    %v1040 = vshrl.u32 %v1039, 7
    %v1041 = vsub.s32 0, %v1040
    %v1042 = vrot.slane %v996, %v1041
    %1044 = vrot.lane.b32.xlu0 %v1042, 112
    %v1045 = vpop.permute.xlu0 %1044
    %v1047 = vmul.f32 %v1037, %v1045
    %v1048 = vmul.f32 %v1038, %v1045
    %v1049 = vadd.f32 %v1035, %v1047
    %v1050 = vadd.f32 %v1036, %v1048
    %v1051 = vld [vmem:[%s5] sm:$0xff]
    %v1052 = vld [vmem:[%s5 + $0x8] sm:$0xff]
    %v1054 = vsel %vm81, %v1049, 0
    %v1057 = vsel %vm81, %v1050, 0
    %1059 = vmatprep.subr.mxu0 0.0
    %1060 = vmatpush1.msra.mxu0 %v1051
    %1061 = vmatprep.subr.mxu0 0.0
    %1062 = vmatpush1.msra.mxu0 %v1052
    %1063 = vmatprep.subr.mxu0 0.0
    %1064 = vmatpush1.msra.mxu0 0.0
    %1065 = vmatprep.subr.mxu0 0.0
    %1066 = vmatpush1.msra.mxu0 0.0
    %1067 = vmatprep.subr.mxu0 0.0
    %1068 = vmatpush1.msra.mxu0 0.0
    %1069 = vmatprep.subr.mxu0 0.0
    %1070 = vmatpush1.msra.mxu0 0.0
    %1071 = vmatprep.subr.mxu0 0.0
    %1072 = vmatpush1.msra.mxu0 0.0
    %1073 = vmatprep.subr.mxu0 0.0
    %1074 = vmatpush1.msra.mxu0 0.0
    %1075 = vmatprep.subr.mxu0 0.0
    %1076 = vmatpush1.msra.mxu0 0.0
    %1077 = vmatprep.subr.mxu0 0.0
    %1078 = vmatpush1.msra.mxu0 0.0
    %1079 = vmatprep.subr.mxu0 0.0
    %1080 = vmatpush1.msra.mxu0 0.0
    %1081 = vmatprep.subr.mxu0 0.0
    %1082 = vmatpush1.msra.mxu0 0.0
    %1083 = vmatprep.subr.mxu0 0.0
    %1084 = vmatpush1.msra.mxu0 0.0
    %1085 = vmatprep.subr.mxu0 0.0
    %1086 = vmatpush1.msra.mxu0 0.0
    %1087 = vmatprep.subr.mxu0 0.0
    %1088 = vmatpush1.msra.mxu0 0.0
    %1089 = vmatprep.subr.mxu0 0.0
    %1090 = vmatpush1.msra.mxu0 0.0
    %1091 = vmatprep.subr.mxu0 0.0
    %1092 = vmatpush1.msra.mxu0 0.0
    %1093 = vmatprep.subr.mxu0 0.0
    %1094 = vmatpush1.msra.mxu0 0.0
    %1095 = vmatprep.subr.mxu0 0.0
    %1096 = vmatpush1.msra.mxu0 0.0
    %1097 = vmatprep.subr.mxu0 0.0
    %1098 = vmatpush1.msra.mxu0 0.0
    %1099 = vmatprep.subr.mxu0 0.0
    %1100 = vmatpush1.msra.mxu0 0.0
    %1101 = vmatprep.subr.mxu0 0.0
    %1102 = vmatpush1.msra.mxu0 0.0
    %1103 = vmatprep.subr.mxu0 0.0
    %1104 = vmatpush1.msra.mxu0 0.0
    %1105 = vmatprep.subr.mxu0 0.0
    %1106 = vmatpush1.msra.mxu0 0.0
    %1107 = vmatprep.subr.mxu0 0.0
    %1108 = vmatpush1.msra.mxu0 0.0
    %1109 = vmatprep.subr.mxu0 0.0
    %1110 = vmatpush1.msra.mxu0 0.0
    %1111 = vmatprep.subr.mxu0 0.0
    %1112 = vmatpush1.msra.mxu0 0.0
    %1113 = vmatprep.subr.mxu0 0.0
    %1114 = vmatpush1.msra.mxu0 0.0
    %1115 = vmatprep.subr.mxu0 0.0
    %1116 = vmatpush1.msra.mxu0 0.0
    %1117 = vmatprep.subr.mxu0 0.0
    %1118 = vmatpush1.msra.mxu0 0.0
    %1119 = vmatprep.subr.mxu0 0.0
    %1120 = vmatpush1.msra.mxu0 0.0
    %1121 = vmatprep.subr.mxu0 0.0
    %1122 = vmatpush1.msra.mxu0 0.0
    %1123 = vmatprep.mubr.f32.mxu0 0.0
    %1124 = vmatmul.mubr.f32.gmra.mrb[0].mxu0 %v1054
    %v1125 = vpop.f32.mrb[0].mxu0
    %v1126 = vadd.f32 0.0, %v1125
    %v1127 = vpop.f32.mrb[0].mxu0
    %1128 = vmatprep.mubr.f32.mxu0 0.0
    %1129 = vmatmul.mubr.f32.gmra.mrb[0].mxu0 %v1057
    %v1130 = vpop.f32.mrb[0].mxu0
    %v1131 = vadd.f32 0.0, %v1130
    %v1132 = vpop.f32.mrb[0].mxu0
    %1133 = vdwg.mxu0
    %v1134 = vmul.f32 %v1126, 0.35355338
    %v1135 = vmul.f32 %v1131, 0.35355338
    %v1136 = vsel %vm505, %v1134, -1e+30
    %v1137 = vsel %vm506, %v1135, -1e+30
    %v1138 = vsel %vm509, %v1136, -inf
    %v1139 = vsel %vm509, %v1137, -inf
    %v1140 = vmax.f32 %v1138, %v1139
    %v1141 = vrot.slane %v1140, 4
    %v1142 = vmax.f32 %v1140, %v1141
    %v1143 = vrot.slane %v1142, 2
    %v1144 = vmax.f32 %v1142, %v1143
    %v1145 = vrot.slane %v1144, 1
    %v1146 = vmax.f32 %v1144, %v1145
    %v1147 = vsub.f32 %v1136, %v1146
    %v1148 = vsub.f32 %v1137, %v1146
    %v1149 = vmul.f32 %v1147, 1.442695
    %v1150 = vpow.pop %v1149
    %v1151 = vmul.f32 %v1148, 1.442695
    %v1152 = vpow.pop %v1151
    %v1153 = vsel %vm509, %v1150, 0.0
    %v1154 = vsel %vm509, %v1152, 0.0
    %v1155 = vadd.f32 %v1153, %v1154
    %v1156 = vrot.slane %v1155, 4
    %v1157 = vadd.f32 %v1155, %v1156
    %v1158 = vrot.slane %v1157, 2
    %v1159 = vadd.f32 %v1157, %v1158
    %v1160 = vrot.slane %v1159, 1
    %v1161 = vadd.f32 %v1159, %v1160
    %v1162 = vrcp.pop %v1161
    %v1163 = vmul.f32 %v1150, %v1162
    %v1164 = vmul.f32 %v1152, %v1162
    %v1165 = vld [vmem:[%s6] sm:$0xf]
    %v1167 = vsel %vm509, %v1163, 0
    %v1170 = vsel %vm509, %v1164, 0
    %v1173 = vsel %vm544, %v1165, 0
    %1175 = vmatprep.subr.mxu0 0.0
    %1176 = vmatpush1.msra.mxu0 %v1173
    %1177 = vmatprep.subr.mxu0 0.0
    %1178 = vmatpush1.msra.mxu0 0.0
    %1179 = vmatprep.subr.mxu0 0.0
    %1180 = vmatpush1.msra.mxu0 0.0
    %1181 = vmatprep.subr.mxu0 0.0
    %1182 = vmatpush1.msra.mxu0 0.0
    %1183 = vmatprep.subr.mxu0 0.0
    %1184 = vmatpush1.msra.mxu0 0.0
    %1185 = vmatprep.subr.mxu0 0.0
    %1186 = vmatpush1.msra.mxu0 0.0
    %1187 = vmatprep.subr.mxu0 0.0
    %1188 = vmatpush1.msra.mxu0 0.0
    %1189 = vmatprep.subr.mxu0 0.0
    %1190 = vmatpush1.msra.mxu0 0.0
    %1191 = vmatprep.subr.mxu0 0.0
    %1192 = vmatpush1.msra.mxu0 0.0
    %1193 = vmatprep.subr.mxu0 0.0
    %1194 = vmatpush1.msra.mxu0 0.0
    %1195 = vmatprep.subr.mxu0 0.0
    %1196 = vmatpush1.msra.mxu0 0.0
    %1197 = vmatprep.subr.mxu0 0.0
    %1198 = vmatpush1.msra.mxu0 0.0
    %1199 = vmatprep.subr.mxu0 0.0
    %1200 = vmatpush1.msra.mxu0 0.0
    %1201 = vmatprep.subr.mxu0 0.0
    %1202 = vmatpush1.msra.mxu0 0.0
    %1203 = vmatprep.subr.mxu0 0.0
    %1204 = vmatpush1.msra.mxu0 0.0
    %1205 = vmatprep.subr.mxu0 0.0
    %1206 = vmatpush1.msra.mxu0 0.0
    %1207 = vmatprep.subr.mxu0 0.0
    %1208 = vmatpush1.msra.mxu0 0.0
    %1209 = vmatprep.subr.mxu0 0.0
    %1210 = vmatpush1.msra.mxu0 0.0
    %1211 = vmatprep.subr.mxu0 0.0
    %1212 = vmatpush1.msra.mxu0 0.0
    %1213 = vmatprep.subr.mxu0 0.0
    %1214 = vmatpush1.msra.mxu0 0.0
    %1215 = vmatprep.subr.mxu0 0.0
    %1216 = vmatpush1.msra.mxu0 0.0
    %1217 = vmatprep.subr.mxu0 0.0
    %1218 = vmatpush1.msra.mxu0 0.0
    %1219 = vmatprep.subr.mxu0 0.0
    %1220 = vmatpush1.msra.mxu0 0.0
    %1221 = vmatprep.subr.mxu0 0.0
    %1222 = vmatpush1.msra.mxu0 0.0
    %1223 = vmatprep.subr.mxu0 0.0
    %1224 = vmatpush1.msra.mxu0 0.0
    %1225 = vmatprep.subr.mxu0 0.0
    %1226 = vmatpush1.msra.mxu0 0.0
    %1227 = vmatprep.subr.mxu0 0.0
    %1228 = vmatpush1.msra.mxu0 0.0
    %1229 = vmatprep.subr.mxu0 0.0
    %1230 = vmatpush1.msra.mxu0 0.0
    %1231 = vmatprep.subr.mxu0 0.0
    %1232 = vmatpush1.msra.mxu0 0.0
    %1233 = vmatprep.subr.mxu0 0.0
    %1234 = vmatpush1.msra.mxu0 0.0
    %1235 = vmatprep.subr.mxu0 0.0
    %1236 = vmatpush1.msra.mxu0 0.0
    %1237 = vmatprep.subr.mxu0 0.0
    %1238 = vmatpush1.msra.mxu0 0.0
    %1239 = vmatprep.mubr.f32.mxu0 0.0
    %1240 = vmatmul.mubr.f32.gmra.mrb[0].mxu0 %v1167
    %v1241 = vpop.f32.mrb[0].mxu0
    %v1242 = vadd.f32 0.0, %v1241
    %v1243 = vpop.f32.mrb[0].mxu0
    %1244 = vmatprep.mubr.f32.mxu0 0.0
    %1245 = vmatmul.mubr.f32.gmra.mrb[0].mxu0 %v1170
    %v1246 = vpop.f32.mrb[0].mxu0
    %v1247 = vadd.f32 0.0, %v1246
    %v1248 = vpop.f32.mrb[0].mxu0
    %1249 = vdwg.mxu0
    %v1250 = vld [vmem:[#allocation8] sm:$0xff]
    %v1251 = vld [vmem:[#allocation8 + $0x8] sm:$0xff]
    %v1252 = vmul.f32 %v1242, %v1250
    %v1253 = vmul.f32 %v1247, %v1251
    %v1254 = vsel %vm86, %v1252, 0.0
    %v1255 = vsel %vm86, %v1253, 0.0
    %v1256 = vadd.f32 %v1254, %v1255
    %v1257 = vrot.slane %v1256, 4
    %v1258 = vadd.f32 %v1256, %v1257
    %v1259 = vrot.slane %v1258, 2
    %v1260 = vadd.f32 %v1258, %v1259
    %v1261 = vrot.slane %v1260, 1
    %v1262 = vadd.f32 %v1260, %v1261
    %v1263 = vld [vmem:[%s18] sm:$0xff]
    %v1264 = vld [vmem:[%s18 + $0x8] sm:$0xff]
    %v1265 = vld [vmem:[%s18 + $0x10] sm:$0xff]
    %v1266 = vld [vmem:[%s18 + $0x18] sm:$0xff]
    %v1268 = vsel %vm86, %v1262, 0
    %1270 = vmatprep.subr.mxu0 0.0
    %1271 = vmatpush1.msra.mxu0 %v1263
    %1272 = vmatprep.subr.mxu0 0.0
    %1273 = vmatpush1.msra.mxu0 %v1264
    %1274 = vmatprep.subr.mxu0 0.0
    %1275 = vmatpush1.msra.mxu0 %v1265
    %1276 = vmatprep.subr.mxu0 0.0
    %1277 = vmatpush1.msra.mxu0 %v1266
    %1278 = vmatprep.subr.mxu0 0.0
    %1279 = vmatpush1.msra.mxu0 0.0
    %1280 = vmatprep.subr.mxu0 0.0
    %1281 = vmatpush1.msra.mxu0 0.0
    %1282 = vmatprep.subr.mxu0 0.0
    %1283 = vmatpush1.msra.mxu0 0.0
    %1284 = vmatprep.subr.mxu0 0.0
    %1285 = vmatpush1.msra.mxu0 0.0
    %1286 = vmatprep.subr.mxu0 0.0
    %1287 = vmatpush1.msra.mxu0 0.0
    %1288 = vmatprep.subr.mxu0 0.0
    %1289 = vmatpush1.msra.mxu0 0.0
    %1290 = vmatprep.subr.mxu0 0.0
    %1291 = vmatpush1.msra.mxu0 0.0
    %1292 = vmatprep.subr.mxu0 0.0
    %1293 = vmatpush1.msra.mxu0 0.0
    %1294 = vmatprep.subr.mxu0 0.0
    %1295 = vmatpush1.msra.mxu0 0.0
    %1296 = vmatprep.subr.mxu0 0.0
    %1297 = vmatpush1.msra.mxu0 0.0
    %1298 = vmatprep.subr.mxu0 0.0
    %1299 = vmatpush1.msra.mxu0 0.0
    %1300 = vmatprep.subr.mxu0 0.0
    %1301 = vmatpush1.msra.mxu0 0.0
    %1302 = vmatprep.subr.mxu0 0.0
    %1303 = vmatpush1.msra.mxu0 0.0
    %1304 = vmatprep.subr.mxu0 0.0
    %1305 = vmatpush1.msra.mxu0 0.0
    %1306 = vmatprep.subr.mxu0 0.0
    %1307 = vmatpush1.msra.mxu0 0.0
    %1308 = vmatprep.subr.mxu0 0.0
    %1309 = vmatpush1.msra.mxu0 0.0
    %1310 = vmatprep.subr.mxu0 0.0
    %1311 = vmatpush1.msra.mxu0 0.0
    %1312 = vmatprep.subr.mxu0 0.0
    %1313 = vmatpush1.msra.mxu0 0.0
    %1314 = vmatprep.subr.mxu0 0.0
    %1315 = vmatpush1.msra.mxu0 0.0
    %1316 = vmatprep.subr.mxu0 0.0
    %1317 = vmatpush1.msra.mxu0 0.0
    %1318 = vmatprep.subr.mxu0 0.0
    %1319 = vmatpush1.msra.mxu0 0.0
    %1320 = vmatprep.subr.mxu0 0.0
    %1321 = vmatpush1.msra.mxu0 0.0
    %1322 = vmatprep.subr.mxu0 0.0
    %1323 = vmatpush1.msra.mxu0 0.0
    %1324 = vmatprep.subr.mxu0 0.0
    %1325 = vmatpush1.msra.mxu0 0.0
    %1326 = vmatprep.subr.mxu0 0.0
    %1327 = vmatpush1.msra.mxu0 0.0
    %1328 = vmatprep.subr.mxu0 0.0
    %1329 = vmatpush1.msra.mxu0 0.0
    %1330 = vmatprep.subr.mxu0 0.0
    %1331 = vmatpush1.msra.mxu0 0.0
    %1332 = vmatprep.subr.mxu0 0.0
    %1333 = vmatpush1.msra.mxu0 0.0
    %1334 = vmatprep.mubr.f32.mxu0 0.0
    %1335 = vmatmul.mubr.f32.gmra.mrb[0].mxu0 %v1268
    %v1336 = vpop.f32.mrb[0].mxu0
    %v1337 = vadd.f32 0.0, %v1336
    %v1338 = vpop.f32.mrb[0].mxu0
    %1339 = vdwg.mxu0
    %v1340 = vadd.f32 %v895, %v1337
    %v1341 = vld [vmem:[%s19] sm:$0x1]
    %v1342 = vmul.f32 %v1340, %v1340
    %v1343 = vsel %vm243, %v1342, 0.0
    %1344 = vadd.xlane.f32.xlu0 %v1343
    %v1345 = vpop.xlane.xlu0 %1344
    %v1346 = vmul.f32 %v1345, %v247
    %v1347 = vadd.f32 %v1346, 1e-05
    %v1348 = vrsqrt.pop %v1347
    %v1349 = vmul.f32 %v1340, %v1348
    %v1350 = vmul.f32 %v1349, %v1341
    %v1351 = vld [vmem:[%s20] sm:$0xff]
    %v1352 = vld [vmem:[%s20 + $0x8] sm:$0xff]
    %v1353 = vld [vmem:[%s20 + $0x10] sm:$0xff]
    %v1354 = vld [vmem:[%s20 + $0x18] sm:$0xff]
    %v1356 = vsel %vm86, %v1350, 0
    %1358 = vmatprep.subr.mxu0 0.0
    %1359 = vmatpush1.msra.mxu0 %v1351
    %1360 = vmatprep.subr.mxu0 0.0
    %1361 = vmatpush1.msra.mxu0 %v1352
    %1362 = vmatprep.subr.mxu0 0.0
    %1363 = vmatpush1.msra.mxu0 %v1353
    %1364 = vmatprep.subr.mxu0 0.0
    %1365 = vmatpush1.msra.mxu0 %v1354
    %1366 = vmatprep.subr.mxu0 0.0
    %1367 = vmatpush1.msra.mxu0 0.0
    %1368 = vmatprep.subr.mxu0 0.0
    %1369 = vmatpush1.msra.mxu0 0.0
    %1370 = vmatprep.subr.mxu0 0.0
    %1371 = vmatpush1.msra.mxu0 0.0
    %1372 = vmatprep.subr.mxu0 0.0
    %1373 = vmatpush1.msra.mxu0 0.0
    %1374 = vmatprep.subr.mxu0 0.0
    %1375 = vmatpush1.msra.mxu0 0.0
    %1376 = vmatprep.subr.mxu0 0.0
    %1377 = vmatpush1.msra.mxu0 0.0
    %1378 = vmatprep.subr.mxu0 0.0
    %1379 = vmatpush1.msra.mxu0 0.0
    %1380 = vmatprep.subr.mxu0 0.0
    %1381 = vmatpush1.msra.mxu0 0.0
    %1382 = vmatprep.subr.mxu0 0.0
    %1383 = vmatpush1.msra.mxu0 0.0
    %1384 = vmatprep.subr.mxu0 0.0
    %1385 = vmatpush1.msra.mxu0 0.0
    %1386 = vmatprep.subr.mxu0 0.0
    %1387 = vmatpush1.msra.mxu0 0.0
    %1388 = vmatprep.subr.mxu0 0.0
    %1389 = vmatpush1.msra.mxu0 0.0
    %1390 = vmatprep.subr.mxu0 0.0
    %1391 = vmatpush1.msra.mxu0 0.0
    %1392 = vmatprep.subr.mxu0 0.0
    %1393 = vmatpush1.msra.mxu0 0.0
    %1394 = vmatprep.subr.mxu0 0.0
    %1395 = vmatpush1.msra.mxu0 0.0
    %1396 = vmatprep.subr.mxu0 0.0
    %1397 = vmatpush1.msra.mxu0 0.0
    %1398 = vmatprep.subr.mxu0 0.0
    %1399 = vmatpush1.msra.mxu0 0.0
    %1400 = vmatprep.subr.mxu0 0.0
    %1401 = vmatpush1.msra.mxu0 0.0
    %1402 = vmatprep.subr.mxu0 0.0
    %1403 = vmatpush1.msra.mxu0 0.0
    %1404 = vmatprep.subr.mxu0 0.0
    %1405 = vmatpush1.msra.mxu0 0.0
    %1406 = vmatprep.subr.mxu0 0.0
    %1407 = vmatpush1.msra.mxu0 0.0
    %1408 = vmatprep.subr.mxu0 0.0
    %1409 = vmatpush1.msra.mxu0 0.0
    %1410 = vmatprep.subr.mxu0 0.0
    %1411 = vmatpush1.msra.mxu0 0.0
    %1412 = vmatprep.subr.mxu0 0.0
    %1413 = vmatpush1.msra.mxu0 0.0
    %1414 = vmatprep.subr.mxu0 0.0
    %1415 = vmatpush1.msra.mxu0 0.0
    %1416 = vmatprep.subr.mxu0 0.0
    %1417 = vmatpush1.msra.mxu0 0.0
    %1418 = vmatprep.subr.mxu0 0.0
    %1419 = vmatpush1.msra.mxu0 0.0
    %1420 = vmatprep.subr.mxu0 0.0
    %1421 = vmatpush1.msra.mxu0 0.0
    %1422 = vmatprep.mubr.f32.mxu0 0.0
    %1423 = vmatmul.mubr.f32.gmra.mrb[0].mxu0 %v1356
    %v1424 = vpop.f32.mrb[0].mxu0
    %v1425 = vadd.f32 0.0, %v1424
    %v1426 = vpop.f32.mrb[0].mxu0
    %1427 = vdwg.mxu0
    %v1428 = vxor.u32 %v1425, 2147483648
    %v1429 = vmul.f32 %v1428, 1.442695
    %v1430 = vpow.pop %v1429
    %v1431 = vadd.f32 %v1430, 1.0
    %v1432 = vrcp.pop %v1431
    %v1433 = vmul.f32 1.0, %v1432
    %v1434 = vmul.f32 %v1425, %v1433
    %1436 = vrot.lane.b32.xlu0 %v1425, 64
    %v1437 = vpop.permute.xlu0 %1436
    %v1439 = vmul.f32 %v1434, %v1437
    %v1440 = vld [vmem:[%s21] sm:$0xff]
    %v1441 = vld [vmem:[%s21 + $0x8] sm:$0xff]
    %v1442 = vld [vmem:[%s21 + $0x10] sm:$0xff]
    %v1443 = vld [vmem:[%s21 + $0x18] sm:$0xff]
    %v1444 = vld [vmem:[%s21 + $0x20] sm:$0xff]
    %v1445 = vld [vmem:[%s21 + $0x28] sm:$0xff]
    %v1446 = vld [vmem:[%s21 + $0x30] sm:$0xff]
    %v1447 = vld [vmem:[%s21 + $0x38] sm:$0xff]
    %v1449 = vsel %vm821, %v1439, 0
    %1451 = vmatprep.subr.mxu0 0.0
    %1452 = vmatpush1.msra.mxu0 %v1440
    %1453 = vmatprep.subr.mxu0 0.0
    %1454 = vmatpush1.msra.mxu0 %v1441
    %1455 = vmatprep.subr.mxu0 0.0
    %1456 = vmatpush1.msra.mxu0 %v1442
    %1457 = vmatprep.subr.mxu0 0.0
    %1458 = vmatpush1.msra.mxu0 %v1443
    %1459 = vmatprep.subr.mxu0 0.0
    %1460 = vmatpush1.msra.mxu0 %v1444
    %1461 = vmatprep.subr.mxu0 0.0
    %1462 = vmatpush1.msra.mxu0 %v1445
    %1463 = vmatprep.subr.mxu0 0.0
    %1464 = vmatpush1.msra.mxu0 %v1446
    %1465 = vmatprep.subr.mxu0 0.0
    %1466 = vmatpush1.msra.mxu0 %v1447
    %1467 = vmatprep.subr.mxu0 0.0
    %1468 = vmatpush1.msra.mxu0 0.0
    %1469 = vmatprep.subr.mxu0 0.0
    %1470 = vmatpush1.msra.mxu0 0.0
    %1471 = vmatprep.subr.mxu0 0.0
    %1472 = vmatpush1.msra.mxu0 0.0
    %1473 = vmatprep.subr.mxu0 0.0
    %1474 = vmatpush1.msra.mxu0 0.0
    %1475 = vmatprep.subr.mxu0 0.0
    %1476 = vmatpush1.msra.mxu0 0.0
    %1477 = vmatprep.subr.mxu0 0.0
    %1478 = vmatpush1.msra.mxu0 0.0
    %1479 = vmatprep.subr.mxu0 0.0
    %1480 = vmatpush1.msra.mxu0 0.0
    %1481 = vmatprep.subr.mxu0 0.0
    %1482 = vmatpush1.msra.mxu0 0.0
    %1483 = vmatprep.subr.mxu0 0.0
    %1484 = vmatpush1.msra.mxu0 0.0
    %1485 = vmatprep.subr.mxu0 0.0
    %1486 = vmatpush1.msra.mxu0 0.0
    %1487 = vmatprep.subr.mxu0 0.0
    %1488 = vmatpush1.msra.mxu0 0.0
    %1489 = vmatprep.subr.mxu0 0.0
    %1490 = vmatpush1.msra.mxu0 0.0
    %1491 = vmatprep.subr.mxu0 0.0
    %1492 = vmatpush1.msra.mxu0 0.0
    %1493 = vmatprep.subr.mxu0 0.0
    %1494 = vmatpush1.msra.mxu0 0.0
    %1495 = vmatprep.subr.mxu0 0.0
    %1496 = vmatpush1.msra.mxu0 0.0
    %1497 = vmatprep.subr.mxu0 0.0
    %1498 = vmatpush1.msra.mxu0 0.0
    %1499 = vmatprep.subr.mxu0 0.0
    %1500 = vmatpush1.msra.mxu0 0.0
    %1501 = vmatprep.subr.mxu0 0.0
    %1502 = vmatpush1.msra.mxu0 0.0
    %1503 = vmatprep.subr.mxu0 0.0
    %1504 = vmatpush1.msra.mxu0 0.0
    %1505 = vmatprep.subr.mxu0 0.0
    %1506 = vmatpush1.msra.mxu0 0.0
    %1507 = vmatprep.subr.mxu0 0.0
    %1508 = vmatpush1.msra.mxu0 0.0
    %1509 = vmatprep.subr.mxu0 0.0
    %1510 = vmatpush1.msra.mxu0 0.0
    %1511 = vmatprep.subr.mxu0 0.0
    %1512 = vmatpush1.msra.mxu0 0.0
    %1513 = vmatprep.subr.mxu0 0.0
    %1514 = vmatpush1.msra.mxu0 0.0
    %1515 = vmatprep.mubr.f32.mxu0 0.0
    %1516 = vmatmul.mubr.f32.gmra.mrb[0].mxu0 %v1449
    %v1517 = vpop.f32.mrb[0].mxu0
    %v1518 = vadd.f32 0.0, %v1517
    %v1519 = vpop.f32.mrb[0].mxu0
    %1520 = vdwg.mxu0
    %v1521 = vadd.f32 %v1340, %v1518
    %p1522 = scmp.ge.s32.totalorder %s104, 7
    // Predicated region
    $region97: #{generate.1} parent=93 // pred_check
      %p1523 = pneg %p1522
    $region98: #{generate.1} parent=93 // pred_check_branch
      %1525 = sbr.rel (%p1523) target = $region100
    $region99: #{generate.1} parent=93 // pred_region
      %v1526 = vld [vmem:[%s8] sm:$0x1]
      %v1527 = vmul.f32 %v1521, %v1521
      %v1528 = vsel %vm243, %v1527, 0.0
      %1529 = vadd.xlane.f32.xlu0 %v1528
      %v1530 = vpop.xlane.xlu0 %1529
      %v1531 = vmul.f32 %v1530, %v247
      %v1532 = vadd.f32 %v1531, 1e-05
      %v1533 = vrsqrt.pop %v1532
      %v1534 = vmul.f32 %v1521, %v1533
      %v1535 = vmul.f32 %v1534, %v1526
      %v1536 = vld [vmem:[%s9] sm:$0xff]
      %v1537 = vld [vmem:[%s9 + $0x8] sm:$0xff]
      %v1538 = vld [vmem:[%s9 + $0x10] sm:$0xff]
      %v1539 = vld [vmem:[%s9 + $0x18] sm:$0xff]
      %v1540 = vld [vmem:[%s9 + $0x20] sm:$0xff]
      %v1541 = vld [vmem:[%s9 + $0x28] sm:$0xff]
      %v1542 = vld [vmem:[%s9 + $0x30] sm:$0xff]
      %v1543 = vld [vmem:[%s9 + $0x38] sm:$0xff]
      %s1544 = ssub.s32 %s104, 7
      %s1545 = sshra.s32 %s1544, 3
      %s1546 = sand.u32 %s1544, 7
      %s1547 = sshra.s32 %s1544, 3
      %s1548 = sand.u32 %s1544, 7
      %s1549 = smul.u32 %s1545, 2
      %s1550 = smul.u32 %s1549, 8
      %s1551 = sadd.s32 %s1550, %s1548
      %s1552 = scalar_lea.vmem %s7, %s1551
      %v1553 = vld [vmem:[%s1552] ss:$8 sm:$0x3]
      %v1555 = vlaneseq
      %v1556 = vshrl.u32 %v1555, 7
      %v1557 = vsub.s32 0, %v1556
      %v1558 = vrot.slane %v1553, %v1557
      %v1559 = vlaneseq
      %v1560 = vshrl.u32 %v1559, 7
      %v1561 = vsub.s32 1, %v1560
      %v1562 = vrot.slane %v1553, %v1561
      %v1566 = vsel %vm86, %v1535, 0
      %1568 = vmatprep.subr.mxu0 %v1537
      %1569 = vmatpush1.msra.mxu0 %v1536
      %1570 = vmatprep.subr.mxu0 %v1539
      %1571 = vmatpush1.msra.mxu0 %v1538
      %1572 = vmatprep.subr.mxu0 %v1541
      %1573 = vmatpush1.msra.mxu0 %v1540
      %1574 = vmatprep.subr.mxu0 %v1543
      %1575 = vmatpush1.msra.mxu0 %v1542
      %1576 = vmatprep.subr.mxu0 0.0
      %1577 = vmatpush1.msra.mxu0 0.0
      %1578 = vmatprep.subr.mxu0 0.0
      %1579 = vmatpush1.msra.mxu0 0.0
      %1580 = vmatprep.subr.mxu0 0.0
      %1581 = vmatpush1.msra.mxu0 0.0
      %1582 = vmatprep.subr.mxu0 0.0
      %1583 = vmatpush1.msra.mxu0 0.0
      %1584 = vmatprep.subr.mxu0 0.0
      %1585 = vmatpush1.msra.mxu0 0.0
      %1586 = vmatprep.subr.mxu0 0.0
      %1587 = vmatpush1.msra.mxu0 0.0
      %1588 = vmatprep.subr.mxu0 0.0
      %1589 = vmatpush1.msra.mxu0 0.0
      %1590 = vmatprep.subr.mxu0 0.0
      %1591 = vmatpush1.msra.mxu0 0.0
      %1592 = vmatprep.subr.mxu0 0.0
      %1593 = vmatpush1.msra.mxu0 0.0
      %1594 = vmatprep.subr.mxu0 0.0
      %1595 = vmatpush1.msra.mxu0 0.0
      %1596 = vmatprep.subr.mxu0 0.0
      %1597 = vmatpush1.msra.mxu0 0.0
      %1598 = vmatprep.subr.mxu0 0.0
      %1599 = vmatpush1.msra.mxu0 0.0
      %1600 = vmatprep.subr.mxu0 0.0
      %1601 = vmatpush1.msra.mxu0 0.0
      %1602 = vmatprep.subr.mxu0 0.0
      %1603 = vmatpush1.msra.mxu0 0.0
      %1604 = vmatprep.subr.mxu0 0.0
      %1605 = vmatpush1.msra.mxu0 0.0
      %1606 = vmatprep.subr.mxu0 0.0
      %1607 = vmatpush1.msra.mxu0 0.0
      %1608 = vmatprep.subr.mxu0 0.0
      %1609 = vmatpush1.msra.mxu0 0.0
      %1610 = vmatprep.subr.mxu0 0.0
      %1611 = vmatpush1.msra.mxu0 0.0
      %1612 = vmatprep.subr.mxu0 0.0
      %1613 = vmatpush1.msra.mxu0 0.0
      %1614 = vmatprep.subr.mxu0 0.0
      %1615 = vmatpush1.msra.mxu0 0.0
      %1616 = vmatprep.subr.mxu0 0.0
      %1617 = vmatpush1.msra.mxu0 0.0
      %1618 = vmatprep.subr.mxu0 0.0
      %1619 = vmatpush1.msra.mxu0 0.0
      %1620 = vmatprep.subr.mxu0 0.0
      %1621 = vmatpush1.msra.mxu0 0.0
      %1622 = vmatprep.subr.mxu0 0.0
      %1623 = vmatpush1.msra.mxu0 0.0
      %1624 = vmatprep.subr.mxu0 0.0
      %1625 = vmatpush1.msra.mxu0 0.0
      %1626 = vmatprep.subr.mxu0 0.0
      %1627 = vmatpush1.msra.mxu0 0.0
      %1628 = vmatprep.subr.mxu0 0.0
      %1629 = vmatpush1.msra.mxu0 0.0
      %1630 = vmatprep.subr.mxu0 0.0
      %1631 = vmatpush1.msra.mxu0 0.0
      %1632 = vmatprep.mubr.f32.mxu0 0.0
      %1633 = vmatmul.mubr.f32.gmra.mrb[0].mxu0 %v1566
      %v1634 = vpop.f32.mrb[0].mxu0
      %v1635 = vadd.f32 %v1558, %v1634
      %v1636 = vpop.f32.mrb[0].mxu0
      %v1637 = vadd.f32 %v1562, %v1636
      %1638 = vdwg.mxu0
      %vm1639 = vcmask 1040384
      %v1640 = vsel %vm1639, %v1635, -inf
      %v1641 = vsel %vm1639, %v1637, -inf
      %v1642 = vmax.f32 %v1640, %v1641
      %1643 = vmax.xlane.f32.xlu0 %v1642
      %v1644 = vpop.xlane.xlu0 %1643
      %vm1645 = vcmp.ge.f32.partialorder %v1635, %v1644
      %vm1646 = vcmp.ge.f32.partialorder %v1637, %v1644
      %v1647 = vsel %vm1645, %v101, 256.0
      %v1648 = vsel %vm1646, %v102, 256.0
      %v1649 = vsel %vm1639, %v1647, inf
      %v1650 = vsel %vm1639, %v1648, inf
      %v1651 = vmin.f32 %v1649, %v1650
      %1652 = vmin.xlane.f32.xlu0 %v1651
      %v1653 = vpop.xlane.xlu0 %1652
      %vm1654 = vcmp.eq.f32.partialorder %v101, %v1653
      %vm1655 = vcmp.eq.f32.partialorder %v102, %v1653
      %v1656 = vsel %vm1654, 1, 0
      %v1657 = vsel %vm1655, 1, 0
      %v1658 = vcvt.s32.f32 %v1656
      %v1659 = vcvt.s32.f32 %v1657
      %v1662 = vcombine.low %v1658, %v1659
      %v1664 = vunpack.c.l.s4 1966171168
      %v1665 = vunpack.c.0.s8 %v1664
      %v1666 = vlaneseq
      %v1667 = vshrl.u32 %v1666, 7
      %v1668 = vsub.s32 %v1665, %v1667
      %v1669 = vrot.slane %v1662, %v1668
      %v1671 = vunpack.c.l.s4 1966171168
      %v1672 = vunpack.c.0.s8 %v1671
      %v1673 = vlaneseq
      %v1674 = vshrl.u32 %v1673, 7
      %v1675 = vsub.s32 %v1672, %v1674
      %v1676 = vrot.slane %v1669, %v1675
      %1678 = vst.msk [vmem:[#allocation2] sm:$0x3] %vm79, %v1676
      %v1679 = vcvt.f32.s32.to.zero.pseudo %v1653
      %s1680 = sadd.s32 %s104, 1
      %s1681 = scalar_lea.vmem %s22, %s1680
      %vm1682 = vcmask 0
      %1683 = vst.msk [vmem:[%s1681] sm:$0x1] %vm1682, %v1679
    $region100: #{generate.1} parent=93 // pred_fallthru
      _
  $region94: #{generate.1} parent=0 // loop_footer
    %s108 = sadd.s32 1, %s104
  $region95: #{generate.1} parent=0 // loop_footer_branch
    %103 = sbr.rel target = $region91
  $region96: #{generate.1} parent=0 // loop_exit
    _
  // Predicated region
  $region101: #{generate.1} parent=0 // pred_check
    _
  $region102: #{generate.1} parent=0 // pred_check_branch
    %1685 = sbr.rel (0) target = $region104
  $region103: #{generate.1} parent=0 // pred_region
    _
  $region104: #{generate.1} parent=0 // pred_fallthru
    _
  // Predicated region
  $region105: #{generate.1} parent=0 // pred_check
    _
  $region106: #{generate.1} parent=0 // pred_check_branch
    %1687 = sbr.rel (0) target = $region108
  $region107: #{generate.1} parent=0 // pred_region
    _
  $region108: #{generate.1} parent=0 // pred_fallthru
    _

</llo_original>
